<compile_context>
chip_gen: v5e
topology: v5e:2x2
jax: 0.10.0
libtpu: 0.0.40
codegen_flags: <defaults>
</compile_context>

<pallas_src>
import functools

import jax
import jax.numpy as jnp
from jax.experimental import pallas as pl
from jax.experimental.pallas import tpu as pltpu


def _adaptive_bounds(i, in_size, out_size):
    """PyTorch AdaptiveAvg/MaxPool2d window [start, end) for output index i."""
    start = (i * in_size) // out_size
    end = -(-((i + 1) * in_size) // out_size)  # ceil
    return start, end


def _center_indices(in_size, L):
    """SelectCenter index list: range(grid_len//2, input_size, grid_len)."""
    grid_len = in_size // L
    return list(range(grid_len // 2, in_size, grid_len))


def _round_up(x, m):
    return -(-x // m) * m


def _pick_s_chunk(S, B, H, W, dtype, budget_bytes=6 << 20):
    """Largest S-chunk whose *padded* VMEM footprint fits one input buffer.

    Uses the real (sublane, 128-lane) tile padding, not nominal bytes, so a
    double-buffered block stays well under every chip's scoped VMEM default
    (v7x: 32 MiB scoped / 64 MiB physical).
    """
    itemsize = jnp.dtype(dtype).itemsize
    sublanes = max(8, 32 // max(itemsize, 1))       # f32: 8, bf16: 16, int8: 32
    per_seq = B * _round_up(H, sublanes) * _round_up(W, 128) * itemsize
    if S * per_seq <= budget_bytes:
        return S                                     # single block, grid=(1,)
    # Split S. Keep the chunk 128-aligned so the output block's lane dim
    # satisfies the (8,128) tiling constraint; the tail is masked via cdiv.
    chunk = max((budget_bytes // per_seq) // 128, 1) * 128
    # TODO(synk): spatial (H/W) tiling for frames so large that even a
    # 128-element seq chunk exceeds the budget is not implemented.
    return min(chunk, S)


def _downsample_kernel(x_ref, o_ref, *, L, version):
    # x_ref: (B, S_chunk, H, W) native-dtype VMEM tile (channel 0 already
    #        selected by the BlockSpec).
    # o_ref: (L*L*version, B, S_chunk) f32 -- one full-row store per pooled cell.
    V = version
    H, W = x_ref.shape[2], x_ref.shape[3]
    c_rows = _center_indices(H, L)
    c_cols = _center_indices(W, L)
    h_bounds = [_adaptive_bounds(i, H, L) for i in range(L)]
    w_bounds = [_adaptive_bounds(j, W, L) for j in range(L)]

    for i in range(L):
        hs, he = h_bounds[i]
        # ---- row stage: reduce H -> 1 for output row i (hoisted over j) ----
        row_ctr = x_ref[:, :, c_rows[i], :].astype(jnp.float32)       # (B,Sc,W)
        row_sum = row_max = None
        if V > 1:
            rows = x_ref[:, :, hs:he, :].astype(jnp.float32)          # (B,Sc,h,W)
            row_sum = jnp.sum(rows, axis=2)                           # (B,Sc,W)
            if V > 2:
                row_max = jnp.max(rows, axis=2)                       # (B,Sc,W)

        # ---- column stage: reduce W -> 1 per cell; store full (B,Sc) rows ----
        for j in range(L):
            ws, we = w_bounds[j]
            base = (i * L + j) * V
            # pool 0: SelectCenter (center element of grid cell (i, j))
            o_ref[base] = row_ctr[:, :, c_cols[j]]                    # (B,Sc)
            if V > 1:
                # pool 1: AdaptiveAvgPool2d == window-sum * 1/area (f32 accum)
                inv_area = 1.0 / float((he - hs) * (we - ws))
                o_ref[base + 1] = (
                    jnp.sum(row_sum[:, :, ws:we], axis=-1) * inv_area)
            if V > 2:
                # pool 2: AdaptiveMaxPool2d
                o_ref[base + 2] = jnp.max(row_max[:, :, ws:we], axis=-1)


def downsample_for_lstm(x, lstm_num_square: int = 3, version: int = 3):
    """x: (batch, channel, seq, H, W) -> (seq, batch, L, L, version) float32."""
    B, _, S, H, W = x.shape
    L, V = int(lstm_num_square), int(version)
    assert 1 <= V <= 3
    # SelectCenter indexes with the *full* center list; if it has more than L
    # entries the module's output shape changes. Guard explicitly.
    assert len(_center_indices(H, L)) == L and len(_center_indices(W, L)) == L, (
        "SelectCenter grid does not match lstm_num_square for this input_size")

    s_chunk = _pick_s_chunk(S, B, H, W, x.dtype)
    grid = (pl.cdiv(S, s_chunk),)

    kernel = functools.partial(_downsample_kernel, L=L, version=V)
    out = pl.pallas_call(
        kernel,
        out_shape=jax.ShapeDtypeStruct((L * L * V, B, S), jnp.float32),
        grid_spec=pltpu.PrefetchScalarGridSpec(
            num_scalar_prefetch=0,
            grid=grid,
            in_specs=[
                # Read channel 0 straight out of the (B, C, S, H, W) input in
                # its native dtype; last-two block dims equal the array dims.
                pl.BlockSpec((B, pl.Squeezed(), s_chunk, H, W),
                             lambda s: (0, 0, s, 0, 0)),
            ],
            out_specs=pl.BlockSpec((L * L * V, B, s_chunk),
                                   lambda s: (0, 0, s)),
        ),
        compiler_params=pltpu.CompilerParams(
            dimension_semantics=("parallel",)),
    )(x)
    # Layout plumbing on the tiny pooled output only:
    # (L*L*V, B, S) -> (L, L, V, B, S) -> (S, B, L, L, V).
    out = out.reshape(L, L, V, B, S)
    return jnp.transpose(out, (4, 3, 0, 1, 2))


def _reference(x, L=3, version=3):
    """Pure-JAX reference mirroring the PyTorch forward."""
    y = jnp.transpose(x[:, 0], (1, 0, 2, 3)).astype(jnp.float32)  # (S,B,H,W)
    _, _, H, W = y.shape
    idx_r = jnp.array(_center_indices(H, L))
    idx_c = jnp.array(_center_indices(W, L))
    outs = [y[:, :, idx_r, :][:, :, :, idx_c]]  # SelectCenter
    if version > 1:
        outs.append(jnp.stack([jnp.stack([
            jnp.mean(y[:, :, slice(*_adaptive_bounds(i, H, L)),
                           slice(*_adaptive_bounds(j, W, L))], axis=(2, 3))
            for j in range(L)], axis=-1) for i in range(L)], axis=-2))
    if version > 2:
        outs.append(jnp.stack([jnp.stack([
            jnp.max(y[:, :, slice(*_adaptive_bounds(i, H, L)),
                          slice(*_adaptive_bounds(j, W, L))], axis=(2, 3))
            for j in range(L)], axis=-1) for i in range(L)], axis=-2))
    return jnp.stack(outs, axis=-1)


if __name__ == "__main__":
    # (batch, channel, seq_len, input_size, input_size)
    batch, channel, seq_len, input_size = 2, 4, 8, 16
    lstm_num_square, version = 3, 3

    key = jax.random.PRNGKey(0)
    x = jax.random.normal(
        key, (batch, channel, seq_len, input_size, input_size),
        dtype=jnp.float32)

    out = downsample_for_lstm(x, lstm_num_square, version)
    out = jax.block_until_ready(out)

    ref = _reference(x, lstm_num_square, version)
    assert out.shape == (seq_len, batch, lstm_num_square, lstm_num_square, version)
    assert bool(jnp.allclose(out, ref, atol=1e-5, rtol=1e-5)), "mismatch vs reference"
    print("KERNEL_OK")
</pallas_src>

<mosaic_0001>
module attributes {stable_mosaic.version = 11 : i64} {
  func.func @_downsample_kernel(%arg0: i32, %arg1: memref<2x1x8x16x16xf32, #tpu.memory_space<vmem>>, %arg2: memref<27x2x8xf32, #tpu.memory_space<vmem>>) attributes {dimension_semantics = [#tpu.dimension_semantics<parallel>], iteration_bounds = array<i64: 1>, scalar_prefetch = 0 : i64, scratch_operands = 0 : i64, tpu.core_type = #tpu.core_type<tc>, window_params = [{transform_indices = @transform_0, window_bounds = array<i64: 2, 1, 8, 16, 16>}, {transform_indices = @transform_1, window_bounds = array<i64: 27, 2, 8>}]} {
    %c0 = arith.constant 0 : index
    %c0_0 = arith.constant 0 : index
    %c0_1 = arith.constant 0 : index
    %c2 = arith.constant 2 : index
    %c0_2 = arith.constant 0 : index
    %0 = vector.load %arg1[%c0, %c0_0, %c0_1, %c2, %c0_2] : memref<2x1x8x16x16xf32, #tpu.memory_space<vmem>>, vector<2x1x8x1x16xf32>
    %1 = vector.shape_cast %0 : vector<2x1x8x1x16xf32> to vector<2x8x16xf32>
    %c0_3 = arith.constant 0 : index
    %c0_4 = arith.constant 0 : index
    %c0_5 = arith.constant 0 : index
    %c0_6 = arith.constant 0 : index
    %c0_7 = arith.constant 0 : index
    %2 = vector.load %arg1[%c0_3, %c0_4, %c0_5, %c0_6, %c0_7] : memref<2x1x8x16x16xf32, #tpu.memory_space<vmem>>, vector<2x1x8x6x16xf32>
    %3 = vector.shape_cast %2 : vector<2x1x8x6x16xf32> to vector<2x8x6x16xf32>
    %cst = arith.constant dense<0.000000e+00> : vector<2x8x16xf32>
    %4 = vector.multi_reduction <add>, %3, %cst [2] : vector<2x8x6x16xf32> to vector<2x8x16xf32>
    %cst_8 = arith.constant dense<0xFF800000> : vector<2x8x16xf32>
    %5 = vector.multi_reduction <maximumf>, %3, %cst_8 [2] : vector<2x8x6x16xf32> to vector<2x8x16xf32>
    %6 = vector.extract_strided_slice %1 {offsets = [0, 0, 2], sizes = [2, 8, 1], strides = [1, 1, 1]} : vector<2x8x16xf32> to vector<2x8x1xf32>
    %7 = vector.shape_cast %6 : vector<2x8x1xf32> to vector<2x8xf32>
    %c0_9 = arith.constant 0 : index
    %c0_10 = arith.constant 0 : index
    %c0_11 = arith.constant 0 : index
    %8 = vector.load %arg2[%c0_9, %c0_10, %c0_11] : memref<27x2x8xf32, #tpu.memory_space<vmem>>, vector<1x2x8xf32>
    %9 = vector.shape_cast %8 : vector<1x2x8xf32> to vector<2x8xf32>
    %10 = vector.shape_cast %7 : vector<2x8xf32> to vector<1x2x8xf32>
    tpu.vector_store %arg2[%c0_9, %c0_10, %c0_11], %10 {strides = array<i32>} : memref<27x2x8xf32, #tpu.memory_space<vmem>>, vector<1x2x8xf32>,
    %11 = vector.extract_strided_slice %4 {offsets = [0, 0, 0], sizes = [2, 8, 6], strides = [1, 1, 1]} : vector<2x8x16xf32> to vector<2x8x6xf32>
    %cst_12 = arith.constant dense<0.000000e+00> : vector<2x8xf32>
    %12 = vector.multi_reduction <add>, %11, %cst_12 [2] : vector<2x8x6xf32> to vector<2x8xf32>
    %cst_13 = arith.constant 0.027777778 : f32
    %13 = vector.broadcast %cst_13 : f32 to vector<2x8xf32>
    %14 = arith.mulf %12, %13 : vector<2x8xf32>
    %c1 = arith.constant 1 : index
    %c0_14 = arith.constant 0 : index
    %c0_15 = arith.constant 0 : index
    %15 = vector.load %arg2[%c1, %c0_14, %c0_15] : memref<27x2x8xf32, #tpu.memory_space<vmem>>, vector<1x2x8xf32>
    %16 = vector.shape_cast %15 : vector<1x2x8xf32> to vector<2x8xf32>
    %17 = vector.shape_cast %14 : vector<2x8xf32> to vector<1x2x8xf32>
    tpu.vector_store %arg2[%c1, %c0_14, %c0_15], %17 {strides = array<i32>} : memref<27x2x8xf32, #tpu.memory_space<vmem>>, vector<1x2x8xf32>,
    %18 = vector.extract_strided_slice %5 {offsets = [0, 0, 0], sizes = [2, 8, 6], strides = [1, 1, 1]} : vector<2x8x16xf32> to vector<2x8x6xf32>
    %cst_16 = arith.constant dense<0xFF800000> : vector<2x8xf32>
    %19 = vector.multi_reduction <maximumf>, %18, %cst_16 [2] : vector<2x8x6xf32> to vector<2x8xf32>
    %c2_17 = arith.constant 2 : index
    %c0_18 = arith.constant 0 : index
    %c0_19 = arith.constant 0 : index
    %20 = vector.load %arg2[%c2_17, %c0_18, %c0_19] : memref<27x2x8xf32, #tpu.memory_space<vmem>>, vector<1x2x8xf32>
    %21 = vector.shape_cast %20 : vector<1x2x8xf32> to vector<2x8xf32>
    %22 = vector.shape_cast %19 : vector<2x8xf32> to vector<1x2x8xf32>
    tpu.vector_store %arg2[%c2_17, %c0_18, %c0_19], %22 {strides = array<i32>} : memref<27x2x8xf32, #tpu.memory_space<vmem>>, vector<1x2x8xf32>,
    %23 = vector.extract_strided_slice %1 {offsets = [0, 0, 7], sizes = [2, 8, 1], strides = [1, 1, 1]} : vector<2x8x16xf32> to vector<2x8x1xf32>
    %24 = vector.shape_cast %23 : vector<2x8x1xf32> to vector<2x8xf32>
    %c3 = arith.constant 3 : index
    %c0_20 = arith.constant 0 : index
    %c0_21 = arith.constant 0 : index
    %25 = vector.load %arg2[%c3, %c0_20, %c0_21] : memref<27x2x8xf32, #tpu.memory_space<vmem>>, vector<1x2x8xf32>
    %26 = vector.shape_cast %25 : vector<1x2x8xf32> to vector<2x8xf32>
    %27 = vector.shape_cast %24 : vector<2x8xf32> to vector<1x2x8xf32>
    tpu.vector_store %arg2[%c3, %c0_20, %c0_21], %27 {strides = array<i32>} : memref<27x2x8xf32, #tpu.memory_space<vmem>>, vector<1x2x8xf32>,
    %28 = vector.extract_strided_slice %4 {offsets = [0, 0, 5], sizes = [2, 8, 6], strides = [1, 1, 1]} : vector<2x8x16xf32> to vector<2x8x6xf32>
    %cst_22 = arith.constant dense<0.000000e+00> : vector<2x8xf32>
    %29 = vector.multi_reduction <add>, %28, %cst_22 [2] : vector<2x8x6xf32> to vector<2x8xf32>
    %cst_23 = arith.constant 0.027777778 : f32
    %30 = vector.broadcast %cst_23 : f32 to vector<2x8xf32>
    %31 = arith.mulf %29, %30 : vector<2x8xf32>
    %c4 = arith.constant 4 : index
    %c0_24 = arith.constant 0 : index
    %c0_25 = arith.constant 0 : index
    %32 = vector.load %arg2[%c4, %c0_24, %c0_25] : memref<27x2x8xf32, #tpu.memory_space<vmem>>, vector<1x2x8xf32>
    %33 = vector.shape_cast %32 : vector<1x2x8xf32> to vector<2x8xf32>
    %34 = vector.shape_cast %31 : vector<2x8xf32> to vector<1x2x8xf32>
    tpu.vector_store %arg2[%c4, %c0_24, %c0_25], %34 {strides = array<i32>} : memref<27x2x8xf32, #tpu.memory_space<vmem>>, vector<1x2x8xf32>,
    %35 = vector.extract_strided_slice %5 {offsets = [0, 0, 5], sizes = [2, 8, 6], strides = [1, 1, 1]} : vector<2x8x16xf32> to vector<2x8x6xf32>
    %cst_26 = arith.constant dense<0xFF800000> : vector<2x8xf32>
    %36 = vector.multi_reduction <maximumf>, %35, %cst_26 [2] : vector<2x8x6xf32> to vector<2x8xf32>
    %c5 = arith.constant 5 : index
    %c0_27 = arith.constant 0 : index
    %c0_28 = arith.constant 0 : index
    %37 = vector.load %arg2[%c5, %c0_27, %c0_28] : memref<27x2x8xf32, #tpu.memory_space<vmem>>, vector<1x2x8xf32>
    %38 = vector.shape_cast %37 : vector<1x2x8xf32> to vector<2x8xf32>
    %39 = vector.shape_cast %36 : vector<2x8xf32> to vector<1x2x8xf32>
    tpu.vector_store %arg2[%c5, %c0_27, %c0_28], %39 {strides = array<i32>} : memref<27x2x8xf32, #tpu.memory_space<vmem>>, vector<1x2x8xf32>,
    %40 = vector.extract_strided_slice %1 {offsets = [0, 0, 12], sizes = [2, 8, 1], strides = [1, 1, 1]} : vector<2x8x16xf32> to vector<2x8x1xf32>
    %41 = vector.shape_cast %40 : vector<2x8x1xf32> to vector<2x8xf32>
    %c6 = arith.constant 6 : index
    %c0_29 = arith.constant 0 : index
    %c0_30 = arith.constant 0 : index
    %42 = vector.load %arg2[%c6, %c0_29, %c0_30] : memref<27x2x8xf32, #tpu.memory_space<vmem>>, vector<1x2x8xf32>
    %43 = vector.shape_cast %42 : vector<1x2x8xf32> to vector<2x8xf32>
    %44 = vector.shape_cast %41 : vector<2x8xf32> to vector<1x2x8xf32>
    tpu.vector_store %arg2[%c6, %c0_29, %c0_30], %44 {strides = array<i32>} : memref<27x2x8xf32, #tpu.memory_space<vmem>>, vector<1x2x8xf32>,
    %45 = vector.extract_strided_slice %4 {offsets = [0, 0, 10], sizes = [2, 8, 6], strides = [1, 1, 1]} : vector<2x8x16xf32> to vector<2x8x6xf32>
    %cst_31 = arith.constant dense<0.000000e+00> : vector<2x8xf32>
    %46 = vector.multi_reduction <add>, %45, %cst_31 [2] : vector<2x8x6xf32> to vector<2x8xf32>
    %cst_32 = arith.constant 0.027777778 : f32
    %47 = vector.broadcast %cst_32 : f32 to vector<2x8xf32>
    %48 = arith.mulf %46, %47 : vector<2x8xf32>
    %c7 = arith.constant 7 : index
    %c0_33 = arith.constant 0 : index
    %c0_34 = arith.constant 0 : index
    %49 = vector.load %arg2[%c7, %c0_33, %c0_34] : memref<27x2x8xf32, #tpu.memory_space<vmem>>, vector<1x2x8xf32>
    %50 = vector.shape_cast %49 : vector<1x2x8xf32> to vector<2x8xf32>
    %51 = vector.shape_cast %48 : vector<2x8xf32> to vector<1x2x8xf32>
    tpu.vector_store %arg2[%c7, %c0_33, %c0_34], %51 {strides = array<i32>} : memref<27x2x8xf32, #tpu.memory_space<vmem>>, vector<1x2x8xf32>,
    %52 = vector.extract_strided_slice %5 {offsets = [0, 0, 10], sizes = [2, 8, 6], strides = [1, 1, 1]} : vector<2x8x16xf32> to vector<2x8x6xf32>
    %cst_35 = arith.constant dense<0xFF800000> : vector<2x8xf32>
    %53 = vector.multi_reduction <maximumf>, %52, %cst_35 [2] : vector<2x8x6xf32> to vector<2x8xf32>
    %c8 = arith.constant 8 : index
    %c0_36 = arith.constant 0 : index
    %c0_37 = arith.constant 0 : index
    %54 = vector.load %arg2[%c8, %c0_36, %c0_37] : memref<27x2x8xf32, #tpu.memory_space<vmem>>, vector<1x2x8xf32>
    %55 = vector.shape_cast %54 : vector<1x2x8xf32> to vector<2x8xf32>
    %56 = vector.shape_cast %53 : vector<2x8xf32> to vector<1x2x8xf32>
    tpu.vector_store %arg2[%c8, %c0_36, %c0_37], %56 {strides = array<i32>} : memref<27x2x8xf32, #tpu.memory_space<vmem>>, vector<1x2x8xf32>,
    %c0_38 = arith.constant 0 : index
    %c0_39 = arith.constant 0 : index
    %c0_40 = arith.constant 0 : index
    %c7_41 = arith.constant 7 : index
    %c0_42 = arith.constant 0 : index
    %57 = vector.load %arg1[%c0_38, %c0_39, %c0_40, %c7_41, %c0_42] : memref<2x1x8x16x16xf32, #tpu.memory_space<vmem>>, vector<2x1x8x1x16xf32>
    %58 = vector.shape_cast %57 : vector<2x1x8x1x16xf32> to vector<2x8x16xf32>
    %c0_43 = arith.constant 0 : index
    %c0_44 = arith.constant 0 : index
    %c0_45 = arith.constant 0 : index
    %c5_46 = arith.constant 5 : index
    %c0_47 = arith.constant 0 : index
    %59 = vector.load %arg1[%c0_43, %c0_44, %c0_45, %c5_46, %c0_47] : memref<2x1x8x16x16xf32, #tpu.memory_space<vmem>>, vector<2x1x8x6x16xf32>
    %60 = vector.shape_cast %59 : vector<2x1x8x6x16xf32> to vector<2x8x6x16xf32>
    %cst_48 = arith.constant dense<0.000000e+00> : vector<2x8x16xf32>
    %61 = vector.multi_reduction <add>, %60, %cst_48 [2] : vector<2x8x6x16xf32> to vector<2x8x16xf32>
    %cst_49 = arith.constant dense<0xFF800000> : vector<2x8x16xf32>
    %62 = vector.multi_reduction <maximumf>, %60, %cst_49 [2] : vector<2x8x6x16xf32> to vector<2x8x16xf32>
    %63 = vector.extract_strided_slice %58 {offsets = [0, 0, 2], sizes = [2, 8, 1], strides = [1, 1, 1]} : vector<2x8x16xf32> to vector<2x8x1xf32>
    %64 = vector.shape_cast %63 : vector<2x8x1xf32> to vector<2x8xf32>
    %c9 = arith.constant 9 : index
    %c0_50 = arith.constant 0 : index
    %c0_51 = arith.constant 0 : index
    %65 = vector.load %arg2[%c9, %c0_50, %c0_51] : memref<27x2x8xf32, #tpu.memory_space<vmem>>, vector<1x2x8xf32>
    %66 = vector.shape_cast %65 : vector<1x2x8xf32> to vector<2x8xf32>
    %67 = vector.shape_cast %64 : vector<2x8xf32> to vector<1x2x8xf32>
    tpu.vector_store %arg2[%c9, %c0_50, %c0_51], %67 {strides = array<i32>} : memref<27x2x8xf32, #tpu.memory_space<vmem>>, vector<1x2x8xf32>,
    %68 = vector.extract_strided_slice %61 {offsets = [0, 0, 0], sizes = [2, 8, 6], strides = [1, 1, 1]} : vector<2x8x16xf32> to vector<2x8x6xf32>
    %cst_52 = arith.constant dense<0.000000e+00> : vector<2x8xf32>
    %69 = vector.multi_reduction <add>, %68, %cst_52 [2] : vector<2x8x6xf32> to vector<2x8xf32>
    %cst_53 = arith.constant 0.027777778 : f32
    %70 = vector.broadcast %cst_53 : f32 to vector<2x8xf32>
    %71 = arith.mulf %69, %70 : vector<2x8xf32>
    %c10 = arith.constant 10 : index
    %c0_54 = arith.constant 0 : index
    %c0_55 = arith.constant 0 : index
    %72 = vector.load %arg2[%c10, %c0_54, %c0_55] : memref<27x2x8xf32, #tpu.memory_space<vmem>>, vector<1x2x8xf32>
    %73 = vector.shape_cast %72 : vector<1x2x8xf32> to vector<2x8xf32>
    %74 = vector.shape_cast %71 : vector<2x8xf32> to vector<1x2x8xf32>
    tpu.vector_store %arg2[%c10, %c0_54, %c0_55], %74 {strides = array<i32>} : memref<27x2x8xf32, #tpu.memory_space<vmem>>, vector<1x2x8xf32>,
    %75 = vector.extract_strided_slice %62 {offsets = [0, 0, 0], sizes = [2, 8, 6], strides = [1, 1, 1]} : vector<2x8x16xf32> to vector<2x8x6xf32>
    %cst_56 = arith.constant dense<0xFF800000> : vector<2x8xf32>
    %76 = vector.multi_reduction <maximumf>, %75, %cst_56 [2] : vector<2x8x6xf32> to vector<2x8xf32>
    %c11 = arith.constant 11 : index
    %c0_57 = arith.constant 0 : index
    %c0_58 = arith.constant 0 : index
    %77 = vector.load %arg2[%c11, %c0_57, %c0_58] : memref<27x2x8xf32, #tpu.memory_space<vmem>>, vector<1x2x8xf32>
    %78 = vector.shape_cast %77 : vector<1x2x8xf32> to vector<2x8xf32>
    %79 = vector.shape_cast %76 : vector<2x8xf32> to vector<1x2x8xf32>
    tpu.vector_store %arg2[%c11, %c0_57, %c0_58], %79 {strides = array<i32>} : memref<27x2x8xf32, #tpu.memory_space<vmem>>, vector<1x2x8xf32>,
    %80 = vector.extract_strided_slice %58 {offsets = [0, 0, 7], sizes = [2, 8, 1], strides = [1, 1, 1]} : vector<2x8x16xf32> to vector<2x8x1xf32>
    %81 = vector.shape_cast %80 : vector<2x8x1xf32> to vector<2x8xf32>
    %c12 = arith.constant 12 : index
    %c0_59 = arith.constant 0 : index
    %c0_60 = arith.constant 0 : index
    %82 = vector.load %arg2[%c12, %c0_59, %c0_60] : memref<27x2x8xf32, #tpu.memory_space<vmem>>, vector<1x2x8xf32>
    %83 = vector.shape_cast %82 : vector<1x2x8xf32> to vector<2x8xf32>
    %84 = vector.shape_cast %81 : vector<2x8xf32> to vector<1x2x8xf32>
    tpu.vector_store %arg2[%c12, %c0_59, %c0_60], %84 {strides = array<i32>} : memref<27x2x8xf32, #tpu.memory_space<vmem>>, vector<1x2x8xf32>,
    %85 = vector.extract_strided_slice %61 {offsets = [0, 0, 5], sizes = [2, 8, 6], strides = [1, 1, 1]} : vector<2x8x16xf32> to vector<2x8x6xf32>
    %cst_61 = arith.constant dense<0.000000e+00> : vector<2x8xf32>
    %86 = vector.multi_reduction <add>, %85, %cst_61 [2] : vector<2x8x6xf32> to vector<2x8xf32>
    %cst_62 = arith.constant 0.027777778 : f32
    %87 = vector.broadcast %cst_62 : f32 to vector<2x8xf32>
    %88 = arith.mulf %86, %87 : vector<2x8xf32>
    %c13 = arith.constant 13 : index
    %c0_63 = arith.constant 0 : index
    %c0_64 = arith.constant 0 : index
    %89 = vector.load %arg2[%c13, %c0_63, %c0_64] : memref<27x2x8xf32, #tpu.memory_space<vmem>>, vector<1x2x8xf32>
    %90 = vector.shape_cast %89 : vector<1x2x8xf32> to vector<2x8xf32>
    %91 = vector.shape_cast %88 : vector<2x8xf32> to vector<1x2x8xf32>
    tpu.vector_store %arg2[%c13, %c0_63, %c0_64], %91 {strides = array<i32>} : memref<27x2x8xf32, #tpu.memory_space<vmem>>, vector<1x2x8xf32>,
    %92 = vector.extract_strided_slice %62 {offsets = [0, 0, 5], sizes = [2, 8, 6], strides = [1, 1, 1]} : vector<2x8x16xf32> to vector<2x8x6xf32>
    %cst_65 = arith.constant dense<0xFF800000> : vector<2x8xf32>
    %93 = vector.multi_reduction <maximumf>, %92, %cst_65 [2] : vector<2x8x6xf32> to vector<2x8xf32>
    %c14 = arith.constant 14 : index
    %c0_66 = arith.constant 0 : index
    %c0_67 = arith.constant 0 : index
    %94 = vector.load %arg2[%c14, %c0_66, %c0_67] : memref<27x2x8xf32, #tpu.memory_space<vmem>>, vector<1x2x8xf32>
    %95 = vector.shape_cast %94 : vector<1x2x8xf32> to vector<2x8xf32>
    %96 = vector.shape_cast %93 : vector<2x8xf32> to vector<1x2x8xf32>
    tpu.vector_store %arg2[%c14, %c0_66, %c0_67], %96 {strides = array<i32>} : memref<27x2x8xf32, #tpu.memory_space<vmem>>, vector<1x2x8xf32>,
    %97 = vector.extract_strided_slice %58 {offsets = [0, 0, 12], sizes = [2, 8, 1], strides = [1, 1, 1]} : vector<2x8x16xf32> to vector<2x8x1xf32>
    %98 = vector.shape_cast %97 : vector<2x8x1xf32> to vector<2x8xf32>
    %c15 = arith.constant 15 : index
    %c0_68 = arith.constant 0 : index
    %c0_69 = arith.constant 0 : index
    %99 = vector.load %arg2[%c15, %c0_68, %c0_69] : memref<27x2x8xf32, #tpu.memory_space<vmem>>, vector<1x2x8xf32>
    %100 = vector.shape_cast %99 : vector<1x2x8xf32> to vector<2x8xf32>
    %101 = vector.shape_cast %98 : vector<2x8xf32> to vector<1x2x8xf32>
    tpu.vector_store %arg2[%c15, %c0_68, %c0_69], %101 {strides = array<i32>} : memref<27x2x8xf32, #tpu.memory_space<vmem>>, vector<1x2x8xf32>,
    %102 = vector.extract_strided_slice %61 {offsets = [0, 0, 10], sizes = [2, 8, 6], strides = [1, 1, 1]} : vector<2x8x16xf32> to vector<2x8x6xf32>
    %cst_70 = arith.constant dense<0.000000e+00> : vector<2x8xf32>
    %103 = vector.multi_reduction <add>, %102, %cst_70 [2] : vector<2x8x6xf32> to vector<2x8xf32>
    %cst_71 = arith.constant 0.027777778 : f32
    %104 = vector.broadcast %cst_71 : f32 to vector<2x8xf32>
    %105 = arith.mulf %103, %104 : vector<2x8xf32>
    %c16 = arith.constant 16 : index
    %c0_72 = arith.constant 0 : index
    %c0_73 = arith.constant 0 : index
    %106 = vector.load %arg2[%c16, %c0_72, %c0_73] : memref<27x2x8xf32, #tpu.memory_space<vmem>>, vector<1x2x8xf32>
    %107 = vector.shape_cast %106 : vector<1x2x8xf32> to vector<2x8xf32>
    %108 = vector.shape_cast %105 : vector<2x8xf32> to vector<1x2x8xf32>
    tpu.vector_store %arg2[%c16, %c0_72, %c0_73], %108 {strides = array<i32>} : memref<27x2x8xf32, #tpu.memory_space<vmem>>, vector<1x2x8xf32>,
    %109 = vector.extract_strided_slice %62 {offsets = [0, 0, 10], sizes = [2, 8, 6], strides = [1, 1, 1]} : vector<2x8x16xf32> to vector<2x8x6xf32>
    %cst_74 = arith.constant dense<0xFF800000> : vector<2x8xf32>
    %110 = vector.multi_reduction <maximumf>, %109, %cst_74 [2] : vector<2x8x6xf32> to vector<2x8xf32>
    %c17 = arith.constant 17 : index
    %c0_75 = arith.constant 0 : index
    %c0_76 = arith.constant 0 : index
    %111 = vector.load %arg2[%c17, %c0_75, %c0_76] : memref<27x2x8xf32, #tpu.memory_space<vmem>>, vector<1x2x8xf32>
    %112 = vector.shape_cast %111 : vector<1x2x8xf32> to vector<2x8xf32>
    %113 = vector.shape_cast %110 : vector<2x8xf32> to vector<1x2x8xf32>
    tpu.vector_store %arg2[%c17, %c0_75, %c0_76], %113 {strides = array<i32>} : memref<27x2x8xf32, #tpu.memory_space<vmem>>, vector<1x2x8xf32>,
    %c0_77 = arith.constant 0 : index
    %c0_78 = arith.constant 0 : index
    %c0_79 = arith.constant 0 : index
    %c12_80 = arith.constant 12 : index
    %c0_81 = arith.constant 0 : index
    %114 = vector.load %arg1[%c0_77, %c0_78, %c0_79, %c12_80, %c0_81] : memref<2x1x8x16x16xf32, #tpu.memory_space<vmem>>, vector<2x1x8x1x16xf32>
    %115 = vector.shape_cast %114 : vector<2x1x8x1x16xf32> to vector<2x8x16xf32>
    %c0_82 = arith.constant 0 : index
    %c0_83 = arith.constant 0 : index
    %c0_84 = arith.constant 0 : index
    %c10_85 = arith.constant 10 : index
    %c0_86 = arith.constant 0 : index
    %116 = vector.load %arg1[%c0_82, %c0_83, %c0_84, %c10_85, %c0_86] : memref<2x1x8x16x16xf32, #tpu.memory_space<vmem>>, vector<2x1x8x6x16xf32>
    %117 = vector.shape_cast %116 : vector<2x1x8x6x16xf32> to vector<2x8x6x16xf32>
    %cst_87 = arith.constant dense<0.000000e+00> : vector<2x8x16xf32>
    %118 = vector.multi_reduction <add>, %117, %cst_87 [2] : vector<2x8x6x16xf32> to vector<2x8x16xf32>
    %cst_88 = arith.constant dense<0xFF800000> : vector<2x8x16xf32>
    %119 = vector.multi_reduction <maximumf>, %117, %cst_88 [2] : vector<2x8x6x16xf32> to vector<2x8x16xf32>
    %120 = vector.extract_strided_slice %115 {offsets = [0, 0, 2], sizes = [2, 8, 1], strides = [1, 1, 1]} : vector<2x8x16xf32> to vector<2x8x1xf32>
    %121 = vector.shape_cast %120 : vector<2x8x1xf32> to vector<2x8xf32>
    %c18 = arith.constant 18 : index
    %c0_89 = arith.constant 0 : index
    %c0_90 = arith.constant 0 : index
    %122 = vector.load %arg2[%c18, %c0_89, %c0_90] : memref<27x2x8xf32, #tpu.memory_space<vmem>>, vector<1x2x8xf32>
    %123 = vector.shape_cast %122 : vector<1x2x8xf32> to vector<2x8xf32>
    %124 = vector.shape_cast %121 : vector<2x8xf32> to vector<1x2x8xf32>
    tpu.vector_store %arg2[%c18, %c0_89, %c0_90], %124 {strides = array<i32>} : memref<27x2x8xf32, #tpu.memory_space<vmem>>, vector<1x2x8xf32>,
    %125 = vector.extract_strided_slice %118 {offsets = [0, 0, 0], sizes = [2, 8, 6], strides = [1, 1, 1]} : vector<2x8x16xf32> to vector<2x8x6xf32>
    %cst_91 = arith.constant dense<0.000000e+00> : vector<2x8xf32>
    %126 = vector.multi_reduction <add>, %125, %cst_91 [2] : vector<2x8x6xf32> to vector<2x8xf32>
    %cst_92 = arith.constant 0.027777778 : f32
    %127 = vector.broadcast %cst_92 : f32 to vector<2x8xf32>
    %128 = arith.mulf %126, %127 : vector<2x8xf32>
    %c19 = arith.constant 19 : index
    %c0_93 = arith.constant 0 : index
    %c0_94 = arith.constant 0 : index
    %129 = vector.load %arg2[%c19, %c0_93, %c0_94] : memref<27x2x8xf32, #tpu.memory_space<vmem>>, vector<1x2x8xf32>
    %130 = vector.shape_cast %129 : vector<1x2x8xf32> to vector<2x8xf32>
    %131 = vector.shape_cast %128 : vector<2x8xf32> to vector<1x2x8xf32>
    tpu.vector_store %arg2[%c19, %c0_93, %c0_94], %131 {strides = array<i32>} : memref<27x2x8xf32, #tpu.memory_space<vmem>>, vector<1x2x8xf32>,
    %132 = vector.extract_strided_slice %119 {offsets = [0, 0, 0], sizes = [2, 8, 6], strides = [1, 1, 1]} : vector<2x8x16xf32> to vector<2x8x6xf32>
    %cst_95 = arith.constant dense<0xFF800000> : vector<2x8xf32>
    %133 = vector.multi_reduction <maximumf>, %132, %cst_95 [2] : vector<2x8x6xf32> to vector<2x8xf32>
    %c20 = arith.constant 20 : index
    %c0_96 = arith.constant 0 : index
    %c0_97 = arith.constant 0 : index
    %134 = vector.load %arg2[%c20, %c0_96, %c0_97] : memref<27x2x8xf32, #tpu.memory_space<vmem>>, vector<1x2x8xf32>
    %135 = vector.shape_cast %134 : vector<1x2x8xf32> to vector<2x8xf32>
    %136 = vector.shape_cast %133 : vector<2x8xf32> to vector<1x2x8xf32>
    tpu.vector_store %arg2[%c20, %c0_96, %c0_97], %136 {strides = array<i32>} : memref<27x2x8xf32, #tpu.memory_space<vmem>>, vector<1x2x8xf32>,
    %137 = vector.extract_strided_slice %115 {offsets = [0, 0, 7], sizes = [2, 8, 1], strides = [1, 1, 1]} : vector<2x8x16xf32> to vector<2x8x1xf32>
    %138 = vector.shape_cast %137 : vector<2x8x1xf32> to vector<2x8xf32>
    %c21 = arith.constant 21 : index
    %c0_98 = arith.constant 0 : index
    %c0_99 = arith.constant 0 : index
    %139 = vector.load %arg2[%c21, %c0_98, %c0_99] : memref<27x2x8xf32, #tpu.memory_space<vmem>>, vector<1x2x8xf32>
    %140 = vector.shape_cast %139 : vector<1x2x8xf32> to vector<2x8xf32>
    %141 = vector.shape_cast %138 : vector<2x8xf32> to vector<1x2x8xf32>
    tpu.vector_store %arg2[%c21, %c0_98, %c0_99], %141 {strides = array<i32>} : memref<27x2x8xf32, #tpu.memory_space<vmem>>, vector<1x2x8xf32>,
    %142 = vector.extract_strided_slice %118 {offsets = [0, 0, 5], sizes = [2, 8, 6], strides = [1, 1, 1]} : vector<2x8x16xf32> to vector<2x8x6xf32>
    %cst_100 = arith.constant dense<0.000000e+00> : vector<2x8xf32>
    %143 = vector.multi_reduction <add>, %142, %cst_100 [2] : vector<2x8x6xf32> to vector<2x8xf32>
    %cst_101 = arith.constant 0.027777778 : f32
    %144 = vector.broadcast %cst_101 : f32 to vector<2x8xf32>
    %145 = arith.mulf %143, %144 : vector<2x8xf32>
    %c22 = arith.constant 22 : index
    %c0_102 = arith.constant 0 : index
    %c0_103 = arith.constant 0 : index
    %146 = vector.load %arg2[%c22, %c0_102, %c0_103] : memref<27x2x8xf32, #tpu.memory_space<vmem>>, vector<1x2x8xf32>
    %147 = vector.shape_cast %146 : vector<1x2x8xf32> to vector<2x8xf32>
    %148 = vector.shape_cast %145 : vector<2x8xf32> to vector<1x2x8xf32>
    tpu.vector_store %arg2[%c22, %c0_102, %c0_103], %148 {strides = array<i32>} : memref<27x2x8xf32, #tpu.memory_space<vmem>>, vector<1x2x8xf32>,
    %149 = vector.extract_strided_slice %119 {offsets = [0, 0, 5], sizes = [2, 8, 6], strides = [1, 1, 1]} : vector<2x8x16xf32> to vector<2x8x6xf32>
    %cst_104 = arith.constant dense<0xFF800000> : vector<2x8xf32>
    %150 = vector.multi_reduction <maximumf>, %149, %cst_104 [2] : vector<2x8x6xf32> to vector<2x8xf32>
    %c23 = arith.constant 23 : index
    %c0_105 = arith.constant 0 : index
    %c0_106 = arith.constant 0 : index
    %151 = vector.load %arg2[%c23, %c0_105, %c0_106] : memref<27x2x8xf32, #tpu.memory_space<vmem>>, vector<1x2x8xf32>
    %152 = vector.shape_cast %151 : vector<1x2x8xf32> to vector<2x8xf32>
    %153 = vector.shape_cast %150 : vector<2x8xf32> to vector<1x2x8xf32>
    tpu.vector_store %arg2[%c23, %c0_105, %c0_106], %153 {strides = array<i32>} : memref<27x2x8xf32, #tpu.memory_space<vmem>>, vector<1x2x8xf32>,
    %154 = vector.extract_strided_slice %115 {offsets = [0, 0, 12], sizes = [2, 8, 1], strides = [1, 1, 1]} : vector<2x8x16xf32> to vector<2x8x1xf32>
    %155 = vector.shape_cast %154 : vector<2x8x1xf32> to vector<2x8xf32>
    %c24 = arith.constant 24 : index
    %c0_107 = arith.constant 0 : index
    %c0_108 = arith.constant 0 : index
    %156 = vector.load %arg2[%c24, %c0_107, %c0_108] : memref<27x2x8xf32, #tpu.memory_space<vmem>>, vector<1x2x8xf32>
    %157 = vector.shape_cast %156 : vector<1x2x8xf32> to vector<2x8xf32>
    %158 = vector.shape_cast %155 : vector<2x8xf32> to vector<1x2x8xf32>
    tpu.vector_store %arg2[%c24, %c0_107, %c0_108], %158 {strides = array<i32>} : memref<27x2x8xf32, #tpu.memory_space<vmem>>, vector<1x2x8xf32>,
    %159 = vector.extract_strided_slice %118 {offsets = [0, 0, 10], sizes = [2, 8, 6], strides = [1, 1, 1]} : vector<2x8x16xf32> to vector<2x8x6xf32>
    %cst_109 = arith.constant dense<0.000000e+00> : vector<2x8xf32>
    %160 = vector.multi_reduction <add>, %159, %cst_109 [2] : vector<2x8x6xf32> to vector<2x8xf32>
    %cst_110 = arith.constant 0.027777778 : f32
    %161 = vector.broadcast %cst_110 : f32 to vector<2x8xf32>
    %162 = arith.mulf %160, %161 : vector<2x8xf32>
    %c25 = arith.constant 25 : index
    %c0_111 = arith.constant 0 : index
    %c0_112 = arith.constant 0 : index
    %163 = vector.load %arg2[%c25, %c0_111, %c0_112] : memref<27x2x8xf32, #tpu.memory_space<vmem>>, vector<1x2x8xf32>
    %164 = vector.shape_cast %163 : vector<1x2x8xf32> to vector<2x8xf32>
    %165 = vector.shape_cast %162 : vector<2x8xf32> to vector<1x2x8xf32>
    tpu.vector_store %arg2[%c25, %c0_111, %c0_112], %165 {strides = array<i32>} : memref<27x2x8xf32, #tpu.memory_space<vmem>>, vector<1x2x8xf32>,
    %166 = vector.extract_strided_slice %119 {offsets = [0, 0, 10], sizes = [2, 8, 6], strides = [1, 1, 1]} : vector<2x8x16xf32> to vector<2x8x6xf32>
    %cst_113 = arith.constant dense<0xFF800000> : vector<2x8xf32>
    %167 = vector.multi_reduction <maximumf>, %166, %cst_113 [2] : vector<2x8x6xf32> to vector<2x8xf32>
    %c26 = arith.constant 26 : index
    %c0_114 = arith.constant 0 : index
    %c0_115 = arith.constant 0 : index
    %168 = vector.load %arg2[%c26, %c0_114, %c0_115] : memref<27x2x8xf32, #tpu.memory_space<vmem>>, vector<1x2x8xf32>
    %169 = vector.shape_cast %168 : vector<1x2x8xf32> to vector<2x8xf32>
    %170 = vector.shape_cast %167 : vector<2x8xf32> to vector<1x2x8xf32>
    tpu.vector_store %arg2[%c26, %c0_114, %c0_115], %170 {strides = array<i32>} : memref<27x2x8xf32, #tpu.memory_space<vmem>>, vector<1x2x8xf32>,
    return
  }
  func.func @transform_0(%arg0: i32) -> (i32, i32, i32, i32, i32) {
    %c0_i32 = arith.constant 0 : i32
    %c0_i32_0 = arith.constant 0 : i32
    %c0_i32_1 = arith.constant 0 : i32
    %c0_i32_2 = arith.constant 0 : i32
    %c0_i32_3 = arith.constant 0 : i32
    return %c0_i32, %c0_i32_0, %arg0, %c0_i32_1, %c0_i32_2 : i32, i32, i32, i32, i32
  }
  func.func @transform_1(%arg0: i32) -> (i32, i32, i32) {
    %c0_i32 = arith.constant 0 : i32
    %c0_i32_0 = arith.constant 0 : i32
    %c0_i32_1 = arith.constant 0 : i32
    return %c0_i32, %c0_i32_0, %arg0 : i32, i32, i32
  }
}

</mosaic_0001>

<llo_original>
// kernel: tpu_custom_call.1
$region0: #{tpu_custom_call.1}
  #allocation0 [shape = 'u32[]', space=smem, size = 0x4, offset = 0x4, fixed_abs, tag = 'smem constant byte address 0x4 - core index']
  #allocation1 [shape = 'u32[72,128]{1,0:T(1,128)}', space=vmem, size = 0x9000, scoped, tag = 'internal scratch']
  #allocation4 [shape = 's32[]', space=sflag, size = 0x4, offset = 0, fixed_abs, tag = 'sflag constant byte address 0x0 - dummy sync flag']
  %s0 = inlined_call_operand.hbm [shape: f32[2,4,8,16,16], index: 0, kind: input, shape index: {}]
  %s1 = inlined_call_operand.vmem [shape: f32[27,2,8], index: 1, kind: output, shape index: {}]
  %s2 = sld [smem:[#allocation0]]
  $region18: #{tpu_custom_call.1} parent=0
    _
  %s4 = ssub.s32 1, %s2
  %s5 = scalar_select 0, %s4, %s2
  $region1: #{tpu_custom_call.1} parent=0
    #allocation2 [shape = 'u8[131072]{0}', space=vmem, size = 0x20000, scoped, tag = 'input window, operand 0, single buffered']
    #allocation3 [shape = 's32[1]{0}', space=sflag, size = 0x4, scoped, tag = 'scoped memory for tpu_custom_call.1']
    %6 = vsyncpa [#allocation3], 0
    // Predicated region
    $region2: #{tpu_custom_call.1} parent=1 // pred_check
      _
    $region3: #{tpu_custom_call.1} parent=1 // pred_check_branch
      %8 = sbr.rel (0) target = $region5
    $region4: #{tpu_custom_call.1} parent=1 // pred_region
      #allocation5 [shape = 'u32[6]{0}', space=smem, size = 0x18, scoped, tag = 'DMA stride descriptor']
      %10 = vsyncadd [#allocation3], 0
      %s12 = sshll.u32 1, 14
      %s13 = sxor.u32 4294967295, %s12
      %s15 = sld [smem:[#allocation0]]
      %s16 = sadd.s32 2, %s15
      %s18 = sshll.u32 7, 26
      %s19 = sxor.u32 4294967295, %s18
      %s20 = sand.u32 0, %s19
      %s21 = sshll.u32 %s16, 26
      %s22 = sor.u32 %s20, %s21
      %s23 = sshll.u32 %s0, 4
      %s24 = int_to_ptr.hbm [resolvable:$true] %s23
      %s25 = sshll.u32 [#allocation2], 4
      %s26 = int_to_ptr.vmem [resolvable:$true] %s25
      %32 = sst [smem:[#allocation5]] 8192
      %s33 = scalar_lea.smem [#allocation5], 1
      %34 = sst [smem:[%s33]] 2048
      %s35 = scalar_lea.smem [#allocation5], 2
      %36 = sst [smem:[%s35]] 16
      %s37 = scalar_lea.smem [#allocation5], 3
      %38 = sst [smem:[%s37]] 128
      %s39 = scalar_lea.smem [#allocation5], 4
      %40 = sst [smem:[%s39]] 128
      %s41 = scalar_lea.smem [#allocation5], 5
      %42 = sst [smem:[%s41]] 8
      %44 = dma.general %s24, 4096, %s26, [#allocation3], [#allocation4], [#allocation5], %s22, 0
    $region5: #{tpu_custom_call.1} parent=1 // pred_fallthru
      _
    // Predicated region
    $region6: #{tpu_custom_call.1} parent=1 // pred_check
      _
    $region7: #{tpu_custom_call.1} parent=1 // pred_check_branch
      %46 = sbr.rel (0) target = $region9
    $region8: #{tpu_custom_call.1} parent=1 // pred_region
      %48 = dma.done [#allocation3], 4096
    $region9: #{tpu_custom_call.1} parent=1 // pred_fallthru
      _
    %v49 = vld [vmem:[#allocation2 + $0x2] sm:$0x1]
    %v50 = vld [vmem:[#allocation2 + $0x12] sm:$0x1]
    %v51 = vld [vmem:[#allocation2 + $0x22] sm:$0x1]
    %v52 = vld [vmem:[#allocation2 + $0x32] sm:$0x1]
    %v53 = vld [vmem:[#allocation2 + $0x42] sm:$0x1]
    %v54 = vld [vmem:[#allocation2 + $0x52] sm:$0x1]
    %v55 = vld [vmem:[#allocation2 + $0x62] sm:$0x1]
    %v56 = vld [vmem:[#allocation2 + $0x72] sm:$0x1]
    %v57 = vld [vmem:[#allocation2 + $0x82] sm:$0x1]
    %v58 = vld [vmem:[#allocation2 + $0x92] sm:$0x1]
    %v59 = vld [vmem:[#allocation2 + $0xa2] sm:$0x1]
    %v60 = vld [vmem:[#allocation2 + $0xb2] sm:$0x1]
    %v61 = vld [vmem:[#allocation2 + $0xc2] sm:$0x1]
    %v62 = vld [vmem:[#allocation2 + $0xd2] sm:$0x1]
    %v63 = vld [vmem:[#allocation2 + $0xe2] sm:$0x1]
    %v64 = vld [vmem:[#allocation2 + $0xf2] sm:$0x1]
    %v65 = vld [vmem:[#allocation2] sm:$0x3f]
    %v66 = vld [vmem:[#allocation2 + $0x10] sm:$0x3f]
    %v67 = vld [vmem:[#allocation2 + $0x20] sm:$0x3f]
    %v68 = vld [vmem:[#allocation2 + $0x30] sm:$0x3f]
    %v69 = vld [vmem:[#allocation2 + $0x40] sm:$0x3f]
    %v70 = vld [vmem:[#allocation2 + $0x50] sm:$0x3f]
    %v71 = vld [vmem:[#allocation2 + $0x60] sm:$0x3f]
    %v72 = vld [vmem:[#allocation2 + $0x70] sm:$0x3f]
    %v73 = vld [vmem:[#allocation2 + $0x80] sm:$0x3f]
    %v74 = vld [vmem:[#allocation2 + $0x90] sm:$0x3f]
    %v75 = vld [vmem:[#allocation2 + $0xa0] sm:$0x3f]
    %v76 = vld [vmem:[#allocation2 + $0xb0] sm:$0x3f]
    %v77 = vld [vmem:[#allocation2 + $0xc0] sm:$0x3f]
    %v78 = vld [vmem:[#allocation2 + $0xd0] sm:$0x3f]
    %v79 = vld [vmem:[#allocation2 + $0xe0] sm:$0x3f]
    %v80 = vld [vmem:[#allocation2 + $0xf0] sm:$0x3f]
    %vm81 = vcmask 128000
    %v82 = vsel %vm81, %v65, 0.0
    %v83 = vrot.slane %v82, 4
    %v84 = vadd.f32 %v82, %v83
    %v85 = vrot.slane %v84, 2
    %v86 = vadd.f32 %v84, %v85
    %v87 = vrot.slane %v86, 1
    %v88 = vadd.f32 %v86, %v87
    %v89 = vsel %vm81, %v66, 0.0
    %v90 = vrot.slane %v89, 4
    %v91 = vadd.f32 %v89, %v90
    %v92 = vrot.slane %v91, 2
    %v93 = vadd.f32 %v91, %v92
    %v94 = vrot.slane %v93, 1
    %v95 = vadd.f32 %v93, %v94
    %v96 = vsel %vm81, %v67, 0.0
    %v97 = vrot.slane %v96, 4
    %v98 = vadd.f32 %v96, %v97
    %v99 = vrot.slane %v98, 2
    %v100 = vadd.f32 %v98, %v99
    %v101 = vrot.slane %v100, 1
    %v102 = vadd.f32 %v100, %v101
    %v103 = vsel %vm81, %v68, 0.0
    %v104 = vrot.slane %v103, 4
    %v105 = vadd.f32 %v103, %v104
    %v106 = vrot.slane %v105, 2
    %v107 = vadd.f32 %v105, %v106
    %v108 = vrot.slane %v107, 1
    %v109 = vadd.f32 %v107, %v108
    %v110 = vsel %vm81, %v69, 0.0
    %v111 = vrot.slane %v110, 4
    %v112 = vadd.f32 %v110, %v111
    %v113 = vrot.slane %v112, 2
    %v114 = vadd.f32 %v112, %v113
    %v115 = vrot.slane %v114, 1
    %v116 = vadd.f32 %v114, %v115
    %v117 = vsel %vm81, %v70, 0.0
    %v118 = vrot.slane %v117, 4
    %v119 = vadd.f32 %v117, %v118
    %v120 = vrot.slane %v119, 2
    %v121 = vadd.f32 %v119, %v120
    %v122 = vrot.slane %v121, 1
    %v123 = vadd.f32 %v121, %v122
    %v124 = vsel %vm81, %v71, 0.0
    %v125 = vrot.slane %v124, 4
    %v126 = vadd.f32 %v124, %v125
    %v127 = vrot.slane %v126, 2
    %v128 = vadd.f32 %v126, %v127
    %v129 = vrot.slane %v128, 1
    %v130 = vadd.f32 %v128, %v129
    %v131 = vsel %vm81, %v72, 0.0
    %v132 = vrot.slane %v131, 4
    %v133 = vadd.f32 %v131, %v132
    %v134 = vrot.slane %v133, 2
    %v135 = vadd.f32 %v133, %v134
    %v136 = vrot.slane %v135, 1
    %v137 = vadd.f32 %v135, %v136
    %v138 = vsel %vm81, %v73, 0.0
    %v139 = vrot.slane %v138, 4
    %v140 = vadd.f32 %v138, %v139
    %v141 = vrot.slane %v140, 2
    %v142 = vadd.f32 %v140, %v141
    %v143 = vrot.slane %v142, 1
    %v144 = vadd.f32 %v142, %v143
    %v145 = vsel %vm81, %v74, 0.0
    %v146 = vrot.slane %v145, 4
    %v147 = vadd.f32 %v145, %v146
    %v148 = vrot.slane %v147, 2
    %v149 = vadd.f32 %v147, %v148
    %v150 = vrot.slane %v149, 1
    %v151 = vadd.f32 %v149, %v150
    %v152 = vsel %vm81, %v75, 0.0
    %v153 = vrot.slane %v152, 4
    %v154 = vadd.f32 %v152, %v153
    %v155 = vrot.slane %v154, 2
    %v156 = vadd.f32 %v154, %v155
    %v157 = vrot.slane %v156, 1
    %v158 = vadd.f32 %v156, %v157
    %v159 = vsel %vm81, %v76, 0.0
    %v160 = vrot.slane %v159, 4
    %v161 = vadd.f32 %v159, %v160
    %v162 = vrot.slane %v161, 2
    %v163 = vadd.f32 %v161, %v162
    %v164 = vrot.slane %v163, 1
    %v165 = vadd.f32 %v163, %v164
    %v166 = vsel %vm81, %v77, 0.0
    %v167 = vrot.slane %v166, 4
    %v168 = vadd.f32 %v166, %v167
    %v169 = vrot.slane %v168, 2
    %v170 = vadd.f32 %v168, %v169
    %v171 = vrot.slane %v170, 1
    %v172 = vadd.f32 %v170, %v171
    %v173 = vsel %vm81, %v78, 0.0
    %v174 = vrot.slane %v173, 4
    %v175 = vadd.f32 %v173, %v174
    %v176 = vrot.slane %v175, 2
    %v177 = vadd.f32 %v175, %v176
    %v178 = vrot.slane %v177, 1
    %v179 = vadd.f32 %v177, %v178
    %v180 = vsel %vm81, %v79, 0.0
    %v181 = vrot.slane %v180, 4
    %v182 = vadd.f32 %v180, %v181
    %v183 = vrot.slane %v182, 2
    %v184 = vadd.f32 %v182, %v183
    %v185 = vrot.slane %v184, 1
    %v186 = vadd.f32 %v184, %v185
    %v187 = vsel %vm81, %v80, 0.0
    %v188 = vrot.slane %v187, 4
    %v189 = vadd.f32 %v187, %v188
    %v190 = vrot.slane %v189, 2
    %v191 = vadd.f32 %v189, %v190
    %v192 = vrot.slane %v191, 1
    %v193 = vadd.f32 %v191, %v192
    %v194 = vsel %vm81, %v65, -inf
    %v195 = vrot.slane %v194, 4
    %v196 = vmax.f32 %v194, %v195
    %v197 = vrot.slane %v196, 2
    %v198 = vmax.f32 %v196, %v197
    %v199 = vrot.slane %v198, 1
    %v200 = vmax.f32 %v198, %v199
    %v201 = vsel %vm81, %v66, -inf
    %v202 = vrot.slane %v201, 4
    %v203 = vmax.f32 %v201, %v202
    %v204 = vrot.slane %v203, 2
    %v205 = vmax.f32 %v203, %v204
    %v206 = vrot.slane %v205, 1
    %v207 = vmax.f32 %v205, %v206
    %v208 = vsel %vm81, %v67, -inf
    %v209 = vrot.slane %v208, 4
    %v210 = vmax.f32 %v208, %v209
    %v211 = vrot.slane %v210, 2
    %v212 = vmax.f32 %v210, %v211
    %v213 = vrot.slane %v212, 1
    %v214 = vmax.f32 %v212, %v213
    %v215 = vsel %vm81, %v68, -inf
    %v216 = vrot.slane %v215, 4
    %v217 = vmax.f32 %v215, %v216
    %v218 = vrot.slane %v217, 2
    %v219 = vmax.f32 %v217, %v218
    %v220 = vrot.slane %v219, 1
    %v221 = vmax.f32 %v219, %v220
    %v222 = vsel %vm81, %v69, -inf
    %v223 = vrot.slane %v222, 4
    %v224 = vmax.f32 %v222, %v223
    %v225 = vrot.slane %v224, 2
    %v226 = vmax.f32 %v224, %v225
    %v227 = vrot.slane %v226, 1
    %v228 = vmax.f32 %v226, %v227
    %v229 = vsel %vm81, %v70, -inf
    %v230 = vrot.slane %v229, 4
    %v231 = vmax.f32 %v229, %v230
    %v232 = vrot.slane %v231, 2
    %v233 = vmax.f32 %v231, %v232
    %v234 = vrot.slane %v233, 1
    %v235 = vmax.f32 %v233, %v234
    %v236 = vsel %vm81, %v71, -inf
    %v237 = vrot.slane %v236, 4
    %v238 = vmax.f32 %v236, %v237
    %v239 = vrot.slane %v238, 2
    %v240 = vmax.f32 %v238, %v239
    %v241 = vrot.slane %v240, 1
    %v242 = vmax.f32 %v240, %v241
    %v243 = vsel %vm81, %v72, -inf
    %v244 = vrot.slane %v243, 4
    %v245 = vmax.f32 %v243, %v244
    %v246 = vrot.slane %v245, 2
    %v247 = vmax.f32 %v245, %v246
    %v248 = vrot.slane %v247, 1
    %v249 = vmax.f32 %v247, %v248
    %v250 = vsel %vm81, %v73, -inf
    %v251 = vrot.slane %v250, 4
    %v252 = vmax.f32 %v250, %v251
    %v253 = vrot.slane %v252, 2
    %v254 = vmax.f32 %v252, %v253
    %v255 = vrot.slane %v254, 1
    %v256 = vmax.f32 %v254, %v255
    %v257 = vsel %vm81, %v74, -inf
    %v258 = vrot.slane %v257, 4
    %v259 = vmax.f32 %v257, %v258
    %v260 = vrot.slane %v259, 2
    %v261 = vmax.f32 %v259, %v260
    %v262 = vrot.slane %v261, 1
    %v263 = vmax.f32 %v261, %v262
    %v264 = vsel %vm81, %v75, -inf
    %v265 = vrot.slane %v264, 4
    %v266 = vmax.f32 %v264, %v265
    %v267 = vrot.slane %v266, 2
    %v268 = vmax.f32 %v266, %v267
    %v269 = vrot.slane %v268, 1
    %v270 = vmax.f32 %v268, %v269
    %v271 = vsel %vm81, %v76, -inf
    %v272 = vrot.slane %v271, 4
    %v273 = vmax.f32 %v271, %v272
    %v274 = vrot.slane %v273, 2
    %v275 = vmax.f32 %v273, %v274
    %v276 = vrot.slane %v275, 1
    %v277 = vmax.f32 %v275, %v276
    %v278 = vsel %vm81, %v77, -inf
    %v279 = vrot.slane %v278, 4
    %v280 = vmax.f32 %v278, %v279
    %v281 = vrot.slane %v280, 2
    %v282 = vmax.f32 %v280, %v281
    %v283 = vrot.slane %v282, 1
    %v284 = vmax.f32 %v282, %v283
    %v285 = vsel %vm81, %v78, -inf
    %v286 = vrot.slane %v285, 4
    %v287 = vmax.f32 %v285, %v286
    %v288 = vrot.slane %v287, 2
    %v289 = vmax.f32 %v287, %v288
    %v290 = vrot.slane %v289, 1
    %v291 = vmax.f32 %v289, %v290
    %v292 = vsel %vm81, %v79, -inf
    %v293 = vrot.slane %v292, 4
    %v294 = vmax.f32 %v292, %v293
    %v295 = vrot.slane %v294, 2
    %v296 = vmax.f32 %v294, %v295
    %v297 = vrot.slane %v296, 1
    %v298 = vmax.f32 %v296, %v297
    %v299 = vsel %vm81, %v80, -inf
    %v300 = vrot.slane %v299, 4
    %v301 = vmax.f32 %v299, %v300
    %v302 = vrot.slane %v301, 2
    %v303 = vmax.f32 %v301, %v302
    %v304 = vrot.slane %v303, 1
    %v305 = vmax.f32 %v303, %v304
    %v322 = vrot.slane %v50, 7
    %vm323 = vcmask 1041409
    %v324 = vsel %vm323, %v322, %v49
    %v325 = vrot.slane %v51, 6
    %vm326 = vcmask 1042434
    %v327 = vsel %vm326, %v325, %v324
    %v328 = vrot.slane %v52, 5
    %vm329 = vcmask 1043459
    %v330 = vsel %vm329, %v328, %v327
    %v331 = vrot.slane %v53, 4
    %vm332 = vcmask 1044484
    %v333 = vsel %vm332, %v331, %v330
    %v334 = vrot.slane %v54, 3
    %vm335 = vcmask 1045509
    %v336 = vsel %vm335, %v334, %v333
    %v337 = vrot.slane %v55, 2
    %vm338 = vcmask 1046534
    %v339 = vsel %vm338, %v337, %v336
    %v340 = vrot.slane %v56, 1
    %vm341 = vcmask 1047559
    %v342 = vsel %vm341, %v340, %v339
    %v343 = vrot.slane %v58, 7
    %v344 = vsel %vm323, %v343, %v57
    %v345 = vrot.slane %v59, 6
    %v346 = vsel %vm326, %v345, %v344
    %v347 = vrot.slane %v60, 5
    %v348 = vsel %vm329, %v347, %v346
    %v349 = vrot.slane %v61, 4
    %v350 = vsel %vm332, %v349, %v348
    %v351 = vrot.slane %v62, 3
    %v352 = vsel %vm335, %v351, %v350
    %v353 = vrot.slane %v63, 2
    %v354 = vsel %vm338, %v353, %v352
    %v355 = vrot.slane %v64, 1
    %v356 = vsel %vm341, %v355, %v354
    %357 = vset.pattern.permute.xlu0 2
    %358 = vperm.xlu0 %357, %v342
    %v359 = vpop.permute.xlu0 %358
    %360 = vset.pattern.permute.xlu0 2
    %361 = vperm.xlu0 %360, %v356
    %v362 = vpop.permute.xlu0 %361
    %v363 = vlaneseq
    %v364 = vand.u32 %v363, 127
    %v365 = vperm.slane %v359, %v364
    %v366 = vperm.slane %v362, %v364
    %v367 = vsel %vm323, %v366, %v365
    %vm369 = vcmask 58368
    %370 = vst.msk [vmem:[%s1] sm:$0x3] %vm369, %v367
    %v387 = vsel %vm323, %v95, %v88
    %v388 = vsel %vm326, %v102, %v387
    %v389 = vsel %vm329, %v109, %v388
    %v390 = vsel %vm332, %v116, %v389
    %v391 = vsel %vm335, %v123, %v390
    %v392 = vsel %vm338, %v130, %v391
    %v393 = vsel %vm341, %v137, %v392
    %v394 = vsel %vm323, %v151, %v144
    %v395 = vsel %vm326, %v158, %v394
    %v396 = vsel %vm329, %v165, %v395
    %v397 = vsel %vm332, %v172, %v396
    %v398 = vsel %vm335, %v179, %v397
    %v399 = vsel %vm338, %v186, %v398
    %v400 = vsel %vm341, %v193, %v399
    %vm403 = vcmask 48128
    %v404 = vsel %vm403, %v393, 0.0
    %405 = vadd.xlane.f32.xlu0 %v404
    %v406 = vpop.xlane.xlu0 %405
    %v407 = vsel %vm403, %v400, 0.0
    %408 = vadd.xlane.f32.xlu0 %v407
    %v409 = vpop.xlane.xlu0 %408
    %v410 = vmul.f32 %v406, 0.027777778
    %v411 = vmul.f32 %v409, 0.027777778
    %v414 = vperm.slane %v410, %v364
    %v415 = vperm.slane %v411, %v364
    %v416 = vsel %vm323, %v415, %v414
    %s418 = scalar_lea.vmem %s1, 2
    %419 = vst.msk [vmem:[%s418] sm:$0x3] %vm369, %v416
    %v436 = vsel %vm323, %v207, %v200
    %v437 = vsel %vm326, %v214, %v436
    %v438 = vsel %vm329, %v221, %v437
    %v439 = vsel %vm332, %v228, %v438
    %v440 = vsel %vm335, %v235, %v439
    %v441 = vsel %vm338, %v242, %v440
    %v442 = vsel %vm341, %v249, %v441
    %v443 = vsel %vm323, %v263, %v256
    %v444 = vsel %vm326, %v270, %v443
    %v445 = vsel %vm329, %v277, %v444
    %v446 = vsel %vm332, %v284, %v445
    %v447 = vsel %vm335, %v291, %v446
    %v448 = vsel %vm338, %v298, %v447
    %v449 = vsel %vm341, %v305, %v448
    %v452 = vsel %vm403, %v442, -inf
    %453 = vmax.xlane.f32.xlu0 %v452
    %v454 = vpop.xlane.xlu0 %453
    %v455 = vsel %vm403, %v449, -inf
    %456 = vmax.xlane.f32.xlu0 %v455
    %v457 = vpop.xlane.xlu0 %456
    %v460 = vperm.slane %v454, %v364
    %v461 = vperm.slane %v457, %v364
    %v462 = vsel %vm323, %v461, %v460
    %s464 = scalar_lea.vmem %s1, 4
    %465 = vst.msk [vmem:[%s464] sm:$0x3] %vm369, %v462
    %466 = vset.pattern.permute.xlu0 7
    %467 = vperm.xlu0 %466, %v342
    %v468 = vpop.permute.xlu0 %467
    %469 = vset.pattern.permute.xlu0 7
    %470 = vperm.xlu0 %469, %v356
    %v471 = vpop.permute.xlu0 %470
    %v472 = vperm.slane %v468, %v364
    %v473 = vperm.slane %v471, %v364
    %v474 = vsel %vm323, %v473, %v472
    %s476 = scalar_lea.vmem %s1, 6
    %477 = vst.msk [vmem:[%s476] sm:$0x3] %vm369, %v474
    %478 = vrot.lane.b32.xlu0 %v393, 123
    %v479 = vpop.permute.xlu0 %478
    %480 = vrot.lane.b32.xlu0 %v400, 123
    %v481 = vpop.permute.xlu0 %480
    %v484 = vsel %vm403, %v479, 0.0
    %485 = vadd.xlane.f32.xlu0 %v484
    %v486 = vpop.xlane.xlu0 %485
    %v487 = vsel %vm403, %v481, 0.0
    %488 = vadd.xlane.f32.xlu0 %v487
    %v489 = vpop.xlane.xlu0 %488
    %v490 = vmul.f32 %v486, 0.027777778
    %v491 = vmul.f32 %v489, 0.027777778
    %v494 = vperm.slane %v490, %v364
    %v495 = vperm.slane %v491, %v364
    %v496 = vsel %vm323, %v495, %v494
    %s498 = scalar_lea.vmem %s1, 8
    %499 = vst.msk [vmem:[%s498] sm:$0x3] %vm369, %v496
    %vm500 = vcmask 89128
    %v501 = vsel %vm500, %v442, -inf
    %502 = vmax.xlane.f32.xlu0 %v501
    %v503 = vpop.xlane.xlu0 %502
    %v504 = vsel %vm500, %v449, -inf
    %505 = vmax.xlane.f32.xlu0 %v504
    %v506 = vpop.xlane.xlu0 %505
    %v509 = vperm.slane %v503, %v364
    %v510 = vperm.slane %v506, %v364
    %v511 = vsel %vm323, %v510, %v509
    %s513 = scalar_lea.vmem %s1, 10
    %514 = vst.msk [vmem:[%s513] sm:$0x3] %vm369, %v511
    %515 = vset.pattern.permute.xlu0 12
    %516 = vperm.xlu0 %515, %v342
    %v517 = vpop.permute.xlu0 %516
    %518 = vset.pattern.permute.xlu0 12
    %519 = vperm.xlu0 %518, %v356
    %v520 = vpop.permute.xlu0 %519
    %v521 = vperm.slane %v517, %v364
    %v522 = vperm.slane %v520, %v364
    %v523 = vsel %vm323, %v522, %v521
    %s525 = scalar_lea.vmem %s1, 12
    %526 = vst.msk [vmem:[%s525] sm:$0x3] %vm369, %v523
    %527 = vrot.lane.b32.xlu0 %v393, 118
    %v528 = vpop.permute.xlu0 %527
    %529 = vrot.lane.b32.xlu0 %v400, 118
    %v530 = vpop.permute.xlu0 %529
    %v533 = vsel %vm403, %v528, 0.0
    %534 = vadd.xlane.f32.xlu0 %v533
    %v535 = vpop.xlane.xlu0 %534
    %v536 = vsel %vm403, %v530, 0.0
    %537 = vadd.xlane.f32.xlu0 %v536
    %v538 = vpop.xlane.xlu0 %537
    %v539 = vmul.f32 %v535, 0.027777778
    %v540 = vmul.f32 %v538, 0.027777778
    %v543 = vperm.slane %v539, %v364
    %v544 = vperm.slane %v540, %v364
    %v545 = vsel %vm323, %v544, %v543
    %s547 = scalar_lea.vmem %s1, 14
    %548 = vst.msk [vmem:[%s547] sm:$0x3] %vm369, %v545
    %vm549 = vcmask 130128
    %v550 = vsel %vm549, %v442, -inf
    %551 = vmax.xlane.f32.xlu0 %v550
    %v552 = vpop.xlane.xlu0 %551
    %v553 = vsel %vm549, %v449, -inf
    %554 = vmax.xlane.f32.xlu0 %v553
    %v555 = vpop.xlane.xlu0 %554
    %v558 = vperm.slane %v552, %v364
    %v559 = vperm.slane %v555, %v364
    %v560 = vsel %vm323, %v559, %v558
    %s562 = scalar_lea.vmem %s1, 16
    %563 = vst.msk [vmem:[%s562] sm:$0x3] %vm369, %v560
    %v564 = vld [vmem:[#allocation2 + $0x7] sm:$0x1]
    %v565 = vld [vmem:[#allocation2 + $0x17] sm:$0x1]
    %v566 = vld [vmem:[#allocation2 + $0x27] sm:$0x1]
    %v567 = vld [vmem:[#allocation2 + $0x37] sm:$0x1]
    %v568 = vld [vmem:[#allocation2 + $0x47] sm:$0x1]
    %v569 = vld [vmem:[#allocation2 + $0x57] sm:$0x1]
    %v570 = vld [vmem:[#allocation2 + $0x67] sm:$0x1]
    %v571 = vld [vmem:[#allocation2 + $0x77] sm:$0x1]
    %v572 = vld [vmem:[#allocation2 + $0x87] sm:$0x1]
    %v573 = vld [vmem:[#allocation2 + $0x97] sm:$0x1]
    %v574 = vld [vmem:[#allocation2 + $0xa7] sm:$0x1]
    %v575 = vld [vmem:[#allocation2 + $0xb7] sm:$0x1]
    %v576 = vld [vmem:[#allocation2 + $0xc7] sm:$0x1]
    %v577 = vld [vmem:[#allocation2 + $0xd7] sm:$0x1]
    %v578 = vld [vmem:[#allocation2 + $0xe7] sm:$0x1]
    %v579 = vld [vmem:[#allocation2 + $0xf7] sm:$0x1]
    %v580 = vld [vmem:[#allocation2 + $0x5] sm:$0x3f]
    %v581 = vld [vmem:[#allocation2 + $0x15] sm:$0x3f]
    %v582 = vld [vmem:[#allocation2 + $0x25] sm:$0x3f]
    %v583 = vld [vmem:[#allocation2 + $0x35] sm:$0x3f]
    %v584 = vld [vmem:[#allocation2 + $0x45] sm:$0x3f]
    %v585 = vld [vmem:[#allocation2 + $0x55] sm:$0x3f]
    %v586 = vld [vmem:[#allocation2 + $0x65] sm:$0x3f]
    %v587 = vld [vmem:[#allocation2 + $0x75] sm:$0x3f]
    %v588 = vld [vmem:[#allocation2 + $0x85] sm:$0x3f]
    %v589 = vld [vmem:[#allocation2 + $0x95] sm:$0x3f]
    %v590 = vld [vmem:[#allocation2 + $0xa5] sm:$0x3f]
    %v591 = vld [vmem:[#allocation2 + $0xb5] sm:$0x3f]
    %v592 = vld [vmem:[#allocation2 + $0xc5] sm:$0x3f]
    %v593 = vld [vmem:[#allocation2 + $0xd5] sm:$0x3f]
    %v594 = vld [vmem:[#allocation2 + $0xe5] sm:$0x3f]
    %v595 = vld [vmem:[#allocation2 + $0xf5] sm:$0x3f]
    %v596 = vsel %vm81, %v580, 0.0
    %v597 = vrot.slane %v596, 4
    %v598 = vadd.f32 %v596, %v597
    %v599 = vrot.slane %v598, 2
    %v600 = vadd.f32 %v598, %v599
    %v601 = vrot.slane %v600, 1
    %v602 = vadd.f32 %v600, %v601
    %v603 = vsel %vm81, %v581, 0.0
    %v604 = vrot.slane %v603, 4
    %v605 = vadd.f32 %v603, %v604
    %v606 = vrot.slane %v605, 2
    %v607 = vadd.f32 %v605, %v606
    %v608 = vrot.slane %v607, 1
    %v609 = vadd.f32 %v607, %v608
    %v610 = vsel %vm81, %v582, 0.0
    %v611 = vrot.slane %v610, 4
    %v612 = vadd.f32 %v610, %v611
    %v613 = vrot.slane %v612, 2
    %v614 = vadd.f32 %v612, %v613
    %v615 = vrot.slane %v614, 1
    %v616 = vadd.f32 %v614, %v615
    %v617 = vsel %vm81, %v583, 0.0
    %v618 = vrot.slane %v617, 4
    %v619 = vadd.f32 %v617, %v618
    %v620 = vrot.slane %v619, 2
    %v621 = vadd.f32 %v619, %v620
    %v622 = vrot.slane %v621, 1
    %v623 = vadd.f32 %v621, %v622
    %v624 = vsel %vm81, %v584, 0.0
    %v625 = vrot.slane %v624, 4
    %v626 = vadd.f32 %v624, %v625
    %v627 = vrot.slane %v626, 2
    %v628 = vadd.f32 %v626, %v627
    %v629 = vrot.slane %v628, 1
    %v630 = vadd.f32 %v628, %v629
    %v631 = vsel %vm81, %v585, 0.0
    %v632 = vrot.slane %v631, 4
    %v633 = vadd.f32 %v631, %v632
    %v634 = vrot.slane %v633, 2
    %v635 = vadd.f32 %v633, %v634
    %v636 = vrot.slane %v635, 1
    %v637 = vadd.f32 %v635, %v636
    %v638 = vsel %vm81, %v586, 0.0
    %v639 = vrot.slane %v638, 4
    %v640 = vadd.f32 %v638, %v639
    %v641 = vrot.slane %v640, 2
    %v642 = vadd.f32 %v640, %v641
    %v643 = vrot.slane %v642, 1
    %v644 = vadd.f32 %v642, %v643
    %v645 = vsel %vm81, %v587, 0.0
    %v646 = vrot.slane %v645, 4
    %v647 = vadd.f32 %v645, %v646
    %v648 = vrot.slane %v647, 2
    %v649 = vadd.f32 %v647, %v648
    %v650 = vrot.slane %v649, 1
    %v651 = vadd.f32 %v649, %v650
    %v652 = vsel %vm81, %v588, 0.0
    %v653 = vrot.slane %v652, 4
    %v654 = vadd.f32 %v652, %v653
    %v655 = vrot.slane %v654, 2
    %v656 = vadd.f32 %v654, %v655
    %v657 = vrot.slane %v656, 1
    %v658 = vadd.f32 %v656, %v657
    %v659 = vsel %vm81, %v589, 0.0
    %v660 = vrot.slane %v659, 4
    %v661 = vadd.f32 %v659, %v660
    %v662 = vrot.slane %v661, 2
    %v663 = vadd.f32 %v661, %v662
    %v664 = vrot.slane %v663, 1
    %v665 = vadd.f32 %v663, %v664
    %v666 = vsel %vm81, %v590, 0.0
    %v667 = vrot.slane %v666, 4
    %v668 = vadd.f32 %v666, %v667
    %v669 = vrot.slane %v668, 2
    %v670 = vadd.f32 %v668, %v669
    %v671 = vrot.slane %v670, 1
    %v672 = vadd.f32 %v670, %v671
    %v673 = vsel %vm81, %v591, 0.0
    %v674 = vrot.slane %v673, 4
    %v675 = vadd.f32 %v673, %v674
    %v676 = vrot.slane %v675, 2
    %v677 = vadd.f32 %v675, %v676
    %v678 = vrot.slane %v677, 1
    %v679 = vadd.f32 %v677, %v678
    %v680 = vsel %vm81, %v592, 0.0
    %v681 = vrot.slane %v680, 4
    %v682 = vadd.f32 %v680, %v681
    %v683 = vrot.slane %v682, 2
    %v684 = vadd.f32 %v682, %v683
    %v685 = vrot.slane %v684, 1
    %v686 = vadd.f32 %v684, %v685
    %v687 = vsel %vm81, %v593, 0.0
    %v688 = vrot.slane %v687, 4
    %v689 = vadd.f32 %v687, %v688
    %v690 = vrot.slane %v689, 2
    %v691 = vadd.f32 %v689, %v690
    %v692 = vrot.slane %v691, 1
    %v693 = vadd.f32 %v691, %v692
    %v694 = vsel %vm81, %v594, 0.0
    %v695 = vrot.slane %v694, 4
    %v696 = vadd.f32 %v694, %v695
    %v697 = vrot.slane %v696, 2
    %v698 = vadd.f32 %v696, %v697
    %v699 = vrot.slane %v698, 1
    %v700 = vadd.f32 %v698, %v699
    %v701 = vsel %vm81, %v595, 0.0
    %v702 = vrot.slane %v701, 4
    %v703 = vadd.f32 %v701, %v702
    %v704 = vrot.slane %v703, 2
    %v705 = vadd.f32 %v703, %v704
    %v706 = vrot.slane %v705, 1
    %v707 = vadd.f32 %v705, %v706
    %v708 = vsel %vm81, %v580, -inf
    %v709 = vrot.slane %v708, 4
    %v710 = vmax.f32 %v708, %v709
    %v711 = vrot.slane %v710, 2
    %v712 = vmax.f32 %v710, %v711
    %v713 = vrot.slane %v712, 1
    %v714 = vmax.f32 %v712, %v713
    %v715 = vsel %vm81, %v581, -inf
    %v716 = vrot.slane %v715, 4
    %v717 = vmax.f32 %v715, %v716
    %v718 = vrot.slane %v717, 2
    %v719 = vmax.f32 %v717, %v718
    %v720 = vrot.slane %v719, 1
    %v721 = vmax.f32 %v719, %v720
    %v722 = vsel %vm81, %v582, -inf
    %v723 = vrot.slane %v722, 4
    %v724 = vmax.f32 %v722, %v723
    %v725 = vrot.slane %v724, 2
    %v726 = vmax.f32 %v724, %v725
    %v727 = vrot.slane %v726, 1
    %v728 = vmax.f32 %v726, %v727
    %v729 = vsel %vm81, %v583, -inf
    %v730 = vrot.slane %v729, 4
    %v731 = vmax.f32 %v729, %v730
    %v732 = vrot.slane %v731, 2
    %v733 = vmax.f32 %v731, %v732
    %v734 = vrot.slane %v733, 1
    %v735 = vmax.f32 %v733, %v734
    %v736 = vsel %vm81, %v584, -inf
    %v737 = vrot.slane %v736, 4
    %v738 = vmax.f32 %v736, %v737
    %v739 = vrot.slane %v738, 2
    %v740 = vmax.f32 %v738, %v739
    %v741 = vrot.slane %v740, 1
    %v742 = vmax.f32 %v740, %v741
    %v743 = vsel %vm81, %v585, -inf
    %v744 = vrot.slane %v743, 4
    %v745 = vmax.f32 %v743, %v744
    %v746 = vrot.slane %v745, 2
    %v747 = vmax.f32 %v745, %v746
    %v748 = vrot.slane %v747, 1
    %v749 = vmax.f32 %v747, %v748
    %v750 = vsel %vm81, %v586, -inf
    %v751 = vrot.slane %v750, 4
    %v752 = vmax.f32 %v750, %v751
    %v753 = vrot.slane %v752, 2
    %v754 = vmax.f32 %v752, %v753
    %v755 = vrot.slane %v754, 1
    %v756 = vmax.f32 %v754, %v755
    %v757 = vsel %vm81, %v587, -inf
    %v758 = vrot.slane %v757, 4
    %v759 = vmax.f32 %v757, %v758
    %v760 = vrot.slane %v759, 2
    %v761 = vmax.f32 %v759, %v760
    %v762 = vrot.slane %v761, 1
    %v763 = vmax.f32 %v761, %v762
    %v764 = vsel %vm81, %v588, -inf
    %v765 = vrot.slane %v764, 4
    %v766 = vmax.f32 %v764, %v765
    %v767 = vrot.slane %v766, 2
    %v768 = vmax.f32 %v766, %v767
    %v769 = vrot.slane %v768, 1
    %v770 = vmax.f32 %v768, %v769
    %v771 = vsel %vm81, %v589, -inf
    %v772 = vrot.slane %v771, 4
    %v773 = vmax.f32 %v771, %v772
    %v774 = vrot.slane %v773, 2
    %v775 = vmax.f32 %v773, %v774
    %v776 = vrot.slane %v775, 1
    %v777 = vmax.f32 %v775, %v776
    %v778 = vsel %vm81, %v590, -inf
    %v779 = vrot.slane %v778, 4
    %v780 = vmax.f32 %v778, %v779
    %v781 = vrot.slane %v780, 2
    %v782 = vmax.f32 %v780, %v781
    %v783 = vrot.slane %v782, 1
    %v784 = vmax.f32 %v782, %v783
    %v785 = vsel %vm81, %v591, -inf
    %v786 = vrot.slane %v785, 4
    %v787 = vmax.f32 %v785, %v786
    %v788 = vrot.slane %v787, 2
    %v789 = vmax.f32 %v787, %v788
    %v790 = vrot.slane %v789, 1
    %v791 = vmax.f32 %v789, %v790
    %v792 = vsel %vm81, %v592, -inf
    %v793 = vrot.slane %v792, 4
    %v794 = vmax.f32 %v792, %v793
    %v795 = vrot.slane %v794, 2
    %v796 = vmax.f32 %v794, %v795
    %v797 = vrot.slane %v796, 1
    %v798 = vmax.f32 %v796, %v797
    %v799 = vsel %vm81, %v593, -inf
    %v800 = vrot.slane %v799, 4
    %v801 = vmax.f32 %v799, %v800
    %v802 = vrot.slane %v801, 2
    %v803 = vmax.f32 %v801, %v802
    %v804 = vrot.slane %v803, 1
    %v805 = vmax.f32 %v803, %v804
    %v806 = vsel %vm81, %v594, -inf
    %v807 = vrot.slane %v806, 4
    %v808 = vmax.f32 %v806, %v807
    %v809 = vrot.slane %v808, 2
    %v810 = vmax.f32 %v808, %v809
    %v811 = vrot.slane %v810, 1
    %v812 = vmax.f32 %v810, %v811
    %v813 = vsel %vm81, %v595, -inf
    %v814 = vrot.slane %v813, 4
    %v815 = vmax.f32 %v813, %v814
    %v816 = vrot.slane %v815, 2
    %v817 = vmax.f32 %v815, %v816
    %v818 = vrot.slane %v817, 1
    %v819 = vmax.f32 %v817, %v818
    %v836 = vrot.slane %v565, 7
    %v837 = vsel %vm323, %v836, %v564
    %v838 = vrot.slane %v566, 6
    %v839 = vsel %vm326, %v838, %v837
    %v840 = vrot.slane %v567, 5
    %v841 = vsel %vm329, %v840, %v839
    %v842 = vrot.slane %v568, 4
    %v843 = vsel %vm332, %v842, %v841
    %v844 = vrot.slane %v569, 3
    %v845 = vsel %vm335, %v844, %v843
    %v846 = vrot.slane %v570, 2
    %v847 = vsel %vm338, %v846, %v845
    %v848 = vrot.slane %v571, 1
    %v849 = vsel %vm341, %v848, %v847
    %v850 = vrot.slane %v573, 7
    %v851 = vsel %vm323, %v850, %v572
    %v852 = vrot.slane %v574, 6
    %v853 = vsel %vm326, %v852, %v851
    %v854 = vrot.slane %v575, 5
    %v855 = vsel %vm329, %v854, %v853
    %v856 = vrot.slane %v576, 4
    %v857 = vsel %vm332, %v856, %v855
    %v858 = vrot.slane %v577, 3
    %v859 = vsel %vm335, %v858, %v857
    %v860 = vrot.slane %v578, 2
    %v861 = vsel %vm338, %v860, %v859
    %v862 = vrot.slane %v579, 1
    %v863 = vsel %vm341, %v862, %v861
    %864 = vset.pattern.permute.xlu0 2
    %865 = vperm.xlu0 %864, %v849
    %v866 = vpop.permute.xlu0 %865
    %867 = vset.pattern.permute.xlu0 2
    %868 = vperm.xlu0 %867, %v863
    %v869 = vpop.permute.xlu0 %868
    %v870 = vperm.slane %v866, %v364
    %v871 = vperm.slane %v869, %v364
    %v872 = vsel %vm323, %v871, %v870
    %s874 = scalar_lea.vmem %s1, 18
    %875 = vst.msk [vmem:[%s874] sm:$0x3] %vm369, %v872
    %v892 = vsel %vm323, %v609, %v602
    %v893 = vsel %vm326, %v616, %v892
    %v894 = vsel %vm329, %v623, %v893
    %v895 = vsel %vm332, %v630, %v894
    %v896 = vsel %vm335, %v637, %v895
    %v897 = vsel %vm338, %v644, %v896
    %v898 = vsel %vm341, %v651, %v897
    %v899 = vsel %vm323, %v665, %v658
    %v900 = vsel %vm326, %v672, %v899
    %v901 = vsel %vm329, %v679, %v900
    %v902 = vsel %vm332, %v686, %v901
    %v903 = vsel %vm335, %v693, %v902
    %v904 = vsel %vm338, %v700, %v903
    %v905 = vsel %vm341, %v707, %v904
    %v908 = vsel %vm403, %v898, 0.0
    %909 = vadd.xlane.f32.xlu0 %v908
    %v910 = vpop.xlane.xlu0 %909
    %v911 = vsel %vm403, %v905, 0.0
    %912 = vadd.xlane.f32.xlu0 %v911
    %v913 = vpop.xlane.xlu0 %912
    %v914 = vmul.f32 %v910, 0.027777778
    %v915 = vmul.f32 %v913, 0.027777778
    %v918 = vperm.slane %v914, %v364
    %v919 = vperm.slane %v915, %v364
    %v920 = vsel %vm323, %v919, %v918
    %s922 = scalar_lea.vmem %s1, 20
    %923 = vst.msk [vmem:[%s922] sm:$0x3] %vm369, %v920
    %v940 = vsel %vm323, %v721, %v714
    %v941 = vsel %vm326, %v728, %v940
    %v942 = vsel %vm329, %v735, %v941
    %v943 = vsel %vm332, %v742, %v942
    %v944 = vsel %vm335, %v749, %v943
    %v945 = vsel %vm338, %v756, %v944
    %v946 = vsel %vm341, %v763, %v945
    %v947 = vsel %vm323, %v777, %v770
    %v948 = vsel %vm326, %v784, %v947
    %v949 = vsel %vm329, %v791, %v948
    %v950 = vsel %vm332, %v798, %v949
    %v951 = vsel %vm335, %v805, %v950
    %v952 = vsel %vm338, %v812, %v951
    %v953 = vsel %vm341, %v819, %v952
    %v956 = vsel %vm403, %v946, -inf
    %957 = vmax.xlane.f32.xlu0 %v956
    %v958 = vpop.xlane.xlu0 %957
    %v959 = vsel %vm403, %v953, -inf
    %960 = vmax.xlane.f32.xlu0 %v959
    %v961 = vpop.xlane.xlu0 %960
    %v964 = vperm.slane %v958, %v364
    %v965 = vperm.slane %v961, %v364
    %v966 = vsel %vm323, %v965, %v964
    %s968 = scalar_lea.vmem %s1, 22
    %969 = vst.msk [vmem:[%s968] sm:$0x3] %vm369, %v966
    %970 = vset.pattern.permute.xlu0 7
    %971 = vperm.xlu0 %970, %v849
    %v972 = vpop.permute.xlu0 %971
    %973 = vset.pattern.permute.xlu0 7
    %974 = vperm.xlu0 %973, %v863
    %v975 = vpop.permute.xlu0 %974
    %v976 = vperm.slane %v972, %v364
    %v977 = vperm.slane %v975, %v364
    %v978 = vsel %vm323, %v977, %v976
    %s980 = scalar_lea.vmem %s1, 24
    %981 = vst.msk [vmem:[%s980] sm:$0x3] %vm369, %v978
    %982 = vrot.lane.b32.xlu0 %v898, 123
    %v983 = vpop.permute.xlu0 %982
    %984 = vrot.lane.b32.xlu0 %v905, 123
    %v985 = vpop.permute.xlu0 %984
    %v988 = vsel %vm403, %v983, 0.0
    %989 = vadd.xlane.f32.xlu0 %v988
    %v990 = vpop.xlane.xlu0 %989
    %v991 = vsel %vm403, %v985, 0.0
    %992 = vadd.xlane.f32.xlu0 %v991
    %v993 = vpop.xlane.xlu0 %992
    %v994 = vmul.f32 %v990, 0.027777778
    %v995 = vmul.f32 %v993, 0.027777778
    %v998 = vperm.slane %v994, %v364
    %v999 = vperm.slane %v995, %v364
    %v1000 = vsel %vm323, %v999, %v998
    %s1002 = scalar_lea.vmem %s1, 26
    %1003 = vst.msk [vmem:[%s1002] sm:$0x3] %vm369, %v1000
    %v1004 = vsel %vm500, %v946, -inf
    %1005 = vmax.xlane.f32.xlu0 %v1004
    %v1006 = vpop.xlane.xlu0 %1005
    %v1007 = vsel %vm500, %v953, -inf
    %1008 = vmax.xlane.f32.xlu0 %v1007
    %v1009 = vpop.xlane.xlu0 %1008
    %v1012 = vperm.slane %v1006, %v364
    %v1013 = vperm.slane %v1009, %v364
    %v1014 = vsel %vm323, %v1013, %v1012
    %s1016 = scalar_lea.vmem %s1, 28
    %1017 = vst.msk [vmem:[%s1016] sm:$0x3] %vm369, %v1014
    %1018 = vset.pattern.permute.xlu0 12
    %1019 = vperm.xlu0 %1018, %v849
    %v1020 = vpop.permute.xlu0 %1019
    %1021 = vset.pattern.permute.xlu0 12
    %1022 = vperm.xlu0 %1021, %v863
    %v1023 = vpop.permute.xlu0 %1022
    %v1024 = vperm.slane %v1020, %v364
    %v1025 = vperm.slane %v1023, %v364
    %v1026 = vsel %vm323, %v1025, %v1024
    %s1028 = scalar_lea.vmem %s1, 30
    %1029 = vst.msk [vmem:[%s1028] sm:$0x3] %vm369, %v1026
    %1030 = vrot.lane.b32.xlu0 %v898, 118
    %v1031 = vpop.permute.xlu0 %1030
    %1032 = vrot.lane.b32.xlu0 %v905, 118
    %v1033 = vpop.permute.xlu0 %1032
    %v1036 = vsel %vm403, %v1031, 0.0
    %1037 = vadd.xlane.f32.xlu0 %v1036
    %v1038 = vpop.xlane.xlu0 %1037
    %v1039 = vsel %vm403, %v1033, 0.0
    %1040 = vadd.xlane.f32.xlu0 %v1039
    %v1041 = vpop.xlane.xlu0 %1040
    %v1042 = vmul.f32 %v1038, 0.027777778
    %v1043 = vmul.f32 %v1041, 0.027777778
    %v1046 = vperm.slane %v1042, %v364
    %v1047 = vperm.slane %v1043, %v364
    %v1048 = vsel %vm323, %v1047, %v1046
    %s1050 = scalar_lea.vmem %s1, 32
    %1051 = vst.msk [vmem:[%s1050] sm:$0x3] %vm369, %v1048
    %v1052 = vsel %vm549, %v946, -inf
    %1053 = vmax.xlane.f32.xlu0 %v1052
    %v1054 = vpop.xlane.xlu0 %1053
    %v1055 = vsel %vm549, %v953, -inf
    %1056 = vmax.xlane.f32.xlu0 %v1055
    %v1057 = vpop.xlane.xlu0 %1056
    %v1060 = vperm.slane %v1054, %v364
    %v1061 = vperm.slane %v1057, %v364
    %v1062 = vsel %vm323, %v1061, %v1060
    %s1064 = scalar_lea.vmem %s1, 34
    %1065 = vst.msk [vmem:[%s1064] sm:$0x3] %vm369, %v1062
    %v1066 = vld [vmem:[#allocation2 + $0xc] sm:$0x1]
    %v1067 = vld [vmem:[#allocation2 + $0x1c] sm:$0x1]
    %v1068 = vld [vmem:[#allocation2 + $0x2c] sm:$0x1]
    %v1069 = vld [vmem:[#allocation2 + $0x3c] sm:$0x1]
    %v1070 = vld [vmem:[#allocation2 + $0x4c] sm:$0x1]
    %v1071 = vld [vmem:[#allocation2 + $0x5c] sm:$0x1]
    %v1072 = vld [vmem:[#allocation2 + $0x6c] sm:$0x1]
    %v1073 = vld [vmem:[#allocation2 + $0x7c] sm:$0x1]
    %v1074 = vld [vmem:[#allocation2 + $0x8c] sm:$0x1]
    %v1075 = vld [vmem:[#allocation2 + $0x9c] sm:$0x1]
    %v1076 = vld [vmem:[#allocation2 + $0xac] sm:$0x1]
    %v1077 = vld [vmem:[#allocation2 + $0xbc] sm:$0x1]
    %v1078 = vld [vmem:[#allocation2 + $0xcc] sm:$0x1]
    %v1079 = vld [vmem:[#allocation2 + $0xdc] sm:$0x1]
    %v1080 = vld [vmem:[#allocation2 + $0xec] sm:$0x1]
    %v1081 = vld [vmem:[#allocation2 + $0xfc] sm:$0x1]
    %v1082 = vld [vmem:[#allocation2 + $0xa] sm:$0x3f]
    %v1083 = vld [vmem:[#allocation2 + $0x1a] sm:$0x3f]
    %v1084 = vld [vmem:[#allocation2 + $0x2a] sm:$0x3f]
    %v1085 = vld [vmem:[#allocation2 + $0x3a] sm:$0x3f]
    %v1086 = vld [vmem:[#allocation2 + $0x4a] sm:$0x3f]
    %v1087 = vld [vmem:[#allocation2 + $0x5a] sm:$0x3f]
    %v1088 = vld [vmem:[#allocation2 + $0x6a] sm:$0x3f]
    %v1089 = vld [vmem:[#allocation2 + $0x7a] sm:$0x3f]
    %v1090 = vld [vmem:[#allocation2 + $0x8a] sm:$0x3f]
    %v1091 = vld [vmem:[#allocation2 + $0x9a] sm:$0x3f]
    %v1092 = vld [vmem:[#allocation2 + $0xaa] sm:$0x3f]
    %v1093 = vld [vmem:[#allocation2 + $0xba] sm:$0x3f]
    %v1094 = vld [vmem:[#allocation2 + $0xca] sm:$0x3f]
    %v1095 = vld [vmem:[#allocation2 + $0xda] sm:$0x3f]
    %v1096 = vld [vmem:[#allocation2 + $0xea] sm:$0x3f]
    %v1097 = vld [vmem:[#allocation2 + $0xfa] sm:$0x3f]
    %v1098 = vsel %vm81, %v1082, 0.0
    %v1099 = vrot.slane %v1098, 4
    %v1100 = vadd.f32 %v1098, %v1099
    %v1101 = vrot.slane %v1100, 2
    %v1102 = vadd.f32 %v1100, %v1101
    %v1103 = vrot.slane %v1102, 1
    %v1104 = vadd.f32 %v1102, %v1103
    %v1105 = vsel %vm81, %v1083, 0.0
    %v1106 = vrot.slane %v1105, 4
    %v1107 = vadd.f32 %v1105, %v1106
    %v1108 = vrot.slane %v1107, 2
    %v1109 = vadd.f32 %v1107, %v1108
    %v1110 = vrot.slane %v1109, 1
    %v1111 = vadd.f32 %v1109, %v1110
    %v1112 = vsel %vm81, %v1084, 0.0
    %v1113 = vrot.slane %v1112, 4
    %v1114 = vadd.f32 %v1112, %v1113
    %v1115 = vrot.slane %v1114, 2
    %v1116 = vadd.f32 %v1114, %v1115
    %v1117 = vrot.slane %v1116, 1
    %v1118 = vadd.f32 %v1116, %v1117
    %v1119 = vsel %vm81, %v1085, 0.0
    %v1120 = vrot.slane %v1119, 4
    %v1121 = vadd.f32 %v1119, %v1120
    %v1122 = vrot.slane %v1121, 2
    %v1123 = vadd.f32 %v1121, %v1122
    %v1124 = vrot.slane %v1123, 1
    %v1125 = vadd.f32 %v1123, %v1124
    %v1126 = vsel %vm81, %v1086, 0.0
    %v1127 = vrot.slane %v1126, 4
    %v1128 = vadd.f32 %v1126, %v1127
    %v1129 = vrot.slane %v1128, 2
    %v1130 = vadd.f32 %v1128, %v1129
    %v1131 = vrot.slane %v1130, 1
    %v1132 = vadd.f32 %v1130, %v1131
    %v1133 = vsel %vm81, %v1087, 0.0
    %v1134 = vrot.slane %v1133, 4
    %v1135 = vadd.f32 %v1133, %v1134
    %v1136 = vrot.slane %v1135, 2
    %v1137 = vadd.f32 %v1135, %v1136
    %v1138 = vrot.slane %v1137, 1
    %v1139 = vadd.f32 %v1137, %v1138
    %v1140 = vsel %vm81, %v1088, 0.0
    %v1141 = vrot.slane %v1140, 4
    %v1142 = vadd.f32 %v1140, %v1141
    %v1143 = vrot.slane %v1142, 2
    %v1144 = vadd.f32 %v1142, %v1143
    %v1145 = vrot.slane %v1144, 1
    %v1146 = vadd.f32 %v1144, %v1145
    %v1147 = vsel %vm81, %v1089, 0.0
    %v1148 = vrot.slane %v1147, 4
    %v1149 = vadd.f32 %v1147, %v1148
    %v1150 = vrot.slane %v1149, 2
    %v1151 = vadd.f32 %v1149, %v1150
    %v1152 = vrot.slane %v1151, 1
    %v1153 = vadd.f32 %v1151, %v1152
    %v1154 = vsel %vm81, %v1090, 0.0
    %v1155 = vrot.slane %v1154, 4
    %v1156 = vadd.f32 %v1154, %v1155
    %v1157 = vrot.slane %v1156, 2
    %v1158 = vadd.f32 %v1156, %v1157
    %v1159 = vrot.slane %v1158, 1
    %v1160 = vadd.f32 %v1158, %v1159
    %v1161 = vsel %vm81, %v1091, 0.0
    %v1162 = vrot.slane %v1161, 4
    %v1163 = vadd.f32 %v1161, %v1162
    %v1164 = vrot.slane %v1163, 2
    %v1165 = vadd.f32 %v1163, %v1164
    %v1166 = vrot.slane %v1165, 1
    %v1167 = vadd.f32 %v1165, %v1166
    %v1168 = vsel %vm81, %v1092, 0.0
    %v1169 = vrot.slane %v1168, 4
    %v1170 = vadd.f32 %v1168, %v1169
    %v1171 = vrot.slane %v1170, 2
    %v1172 = vadd.f32 %v1170, %v1171
    %v1173 = vrot.slane %v1172, 1
    %v1174 = vadd.f32 %v1172, %v1173
    %v1175 = vsel %vm81, %v1093, 0.0
    %v1176 = vrot.slane %v1175, 4
    %v1177 = vadd.f32 %v1175, %v1176
    %v1178 = vrot.slane %v1177, 2
    %v1179 = vadd.f32 %v1177, %v1178
    %v1180 = vrot.slane %v1179, 1
    %v1181 = vadd.f32 %v1179, %v1180
    %v1182 = vsel %vm81, %v1094, 0.0
    %v1183 = vrot.slane %v1182, 4
    %v1184 = vadd.f32 %v1182, %v1183
    %v1185 = vrot.slane %v1184, 2
    %v1186 = vadd.f32 %v1184, %v1185
    %v1187 = vrot.slane %v1186, 1
    %v1188 = vadd.f32 %v1186, %v1187
    %v1189 = vsel %vm81, %v1095, 0.0
    %v1190 = vrot.slane %v1189, 4
    %v1191 = vadd.f32 %v1189, %v1190
    %v1192 = vrot.slane %v1191, 2
    %v1193 = vadd.f32 %v1191, %v1192
    %v1194 = vrot.slane %v1193, 1
    %v1195 = vadd.f32 %v1193, %v1194
    %v1196 = vsel %vm81, %v1096, 0.0
    %v1197 = vrot.slane %v1196, 4
    %v1198 = vadd.f32 %v1196, %v1197
    %v1199 = vrot.slane %v1198, 2
    %v1200 = vadd.f32 %v1198, %v1199
    %v1201 = vrot.slane %v1200, 1
    %v1202 = vadd.f32 %v1200, %v1201
    %v1203 = vsel %vm81, %v1097, 0.0
    %v1204 = vrot.slane %v1203, 4
    %v1205 = vadd.f32 %v1203, %v1204
    %v1206 = vrot.slane %v1205, 2
    %v1207 = vadd.f32 %v1205, %v1206
    %v1208 = vrot.slane %v1207, 1
    %v1209 = vadd.f32 %v1207, %v1208
    %v1210 = vsel %vm81, %v1082, -inf
    %v1211 = vrot.slane %v1210, 4
    %v1212 = vmax.f32 %v1210, %v1211
    %v1213 = vrot.slane %v1212, 2
    %v1214 = vmax.f32 %v1212, %v1213
    %v1215 = vrot.slane %v1214, 1
    %v1216 = vmax.f32 %v1214, %v1215
    %v1217 = vsel %vm81, %v1083, -inf
    %v1218 = vrot.slane %v1217, 4
    %v1219 = vmax.f32 %v1217, %v1218
    %v1220 = vrot.slane %v1219, 2
    %v1221 = vmax.f32 %v1219, %v1220
    %v1222 = vrot.slane %v1221, 1
    %v1223 = vmax.f32 %v1221, %v1222
    %v1224 = vsel %vm81, %v1084, -inf
    %v1225 = vrot.slane %v1224, 4
    %v1226 = vmax.f32 %v1224, %v1225
    %v1227 = vrot.slane %v1226, 2
    %v1228 = vmax.f32 %v1226, %v1227
    %v1229 = vrot.slane %v1228, 1
    %v1230 = vmax.f32 %v1228, %v1229
    %v1231 = vsel %vm81, %v1085, -inf
    %v1232 = vrot.slane %v1231, 4
    %v1233 = vmax.f32 %v1231, %v1232
    %v1234 = vrot.slane %v1233, 2
    %v1235 = vmax.f32 %v1233, %v1234
    %v1236 = vrot.slane %v1235, 1
    %v1237 = vmax.f32 %v1235, %v1236
    %v1238 = vsel %vm81, %v1086, -inf
    %v1239 = vrot.slane %v1238, 4
    %v1240 = vmax.f32 %v1238, %v1239
    %v1241 = vrot.slane %v1240, 2
    %v1242 = vmax.f32 %v1240, %v1241
    %v1243 = vrot.slane %v1242, 1
    %v1244 = vmax.f32 %v1242, %v1243
    %v1245 = vsel %vm81, %v1087, -inf
    %v1246 = vrot.slane %v1245, 4
    %v1247 = vmax.f32 %v1245, %v1246
    %v1248 = vrot.slane %v1247, 2
    %v1249 = vmax.f32 %v1247, %v1248
    %v1250 = vrot.slane %v1249, 1
    %v1251 = vmax.f32 %v1249, %v1250
    %v1252 = vsel %vm81, %v1088, -inf
    %v1253 = vrot.slane %v1252, 4
    %v1254 = vmax.f32 %v1252, %v1253
    %v1255 = vrot.slane %v1254, 2
    %v1256 = vmax.f32 %v1254, %v1255
    %v1257 = vrot.slane %v1256, 1
    %v1258 = vmax.f32 %v1256, %v1257
    %v1259 = vsel %vm81, %v1089, -inf
    %v1260 = vrot.slane %v1259, 4
    %v1261 = vmax.f32 %v1259, %v1260
    %v1262 = vrot.slane %v1261, 2
    %v1263 = vmax.f32 %v1261, %v1262
    %v1264 = vrot.slane %v1263, 1
    %v1265 = vmax.f32 %v1263, %v1264
    %v1266 = vsel %vm81, %v1090, -inf
    %v1267 = vrot.slane %v1266, 4
    %v1268 = vmax.f32 %v1266, %v1267
    %v1269 = vrot.slane %v1268, 2
    %v1270 = vmax.f32 %v1268, %v1269
    %v1271 = vrot.slane %v1270, 1
    %v1272 = vmax.f32 %v1270, %v1271
    %v1273 = vsel %vm81, %v1091, -inf
    %v1274 = vrot.slane %v1273, 4
    %v1275 = vmax.f32 %v1273, %v1274
    %v1276 = vrot.slane %v1275, 2
    %v1277 = vmax.f32 %v1275, %v1276
    %v1278 = vrot.slane %v1277, 1
    %v1279 = vmax.f32 %v1277, %v1278
    %v1280 = vsel %vm81, %v1092, -inf
    %v1281 = vrot.slane %v1280, 4
    %v1282 = vmax.f32 %v1280, %v1281
    %v1283 = vrot.slane %v1282, 2
    %v1284 = vmax.f32 %v1282, %v1283
    %v1285 = vrot.slane %v1284, 1
    %v1286 = vmax.f32 %v1284, %v1285
    %v1287 = vsel %vm81, %v1093, -inf
    %v1288 = vrot.slane %v1287, 4
    %v1289 = vmax.f32 %v1287, %v1288
    %v1290 = vrot.slane %v1289, 2
    %v1291 = vmax.f32 %v1289, %v1290
    %v1292 = vrot.slane %v1291, 1
    %v1293 = vmax.f32 %v1291, %v1292
    %v1294 = vsel %vm81, %v1094, -inf
    %v1295 = vrot.slane %v1294, 4
    %v1296 = vmax.f32 %v1294, %v1295
    %v1297 = vrot.slane %v1296, 2
    %v1298 = vmax.f32 %v1296, %v1297
    %v1299 = vrot.slane %v1298, 1
    %v1300 = vmax.f32 %v1298, %v1299
    %v1301 = vsel %vm81, %v1095, -inf
    %v1302 = vrot.slane %v1301, 4
    %v1303 = vmax.f32 %v1301, %v1302
    %v1304 = vrot.slane %v1303, 2
    %v1305 = vmax.f32 %v1303, %v1304
    %v1306 = vrot.slane %v1305, 1
    %v1307 = vmax.f32 %v1305, %v1306
    %v1308 = vsel %vm81, %v1096, -inf
    %v1309 = vrot.slane %v1308, 4
    %v1310 = vmax.f32 %v1308, %v1309
    %v1311 = vrot.slane %v1310, 2
    %v1312 = vmax.f32 %v1310, %v1311
    %v1313 = vrot.slane %v1312, 1
    %v1314 = vmax.f32 %v1312, %v1313
    %v1315 = vsel %vm81, %v1097, -inf
    %v1316 = vrot.slane %v1315, 4
    %v1317 = vmax.f32 %v1315, %v1316
    %v1318 = vrot.slane %v1317, 2
    %v1319 = vmax.f32 %v1317, %v1318
    %v1320 = vrot.slane %v1319, 1
    %v1321 = vmax.f32 %v1319, %v1320
    %v1338 = vrot.slane %v1067, 7
    %v1339 = vsel %vm323, %v1338, %v1066
    %v1340 = vrot.slane %v1068, 6
    %v1341 = vsel %vm326, %v1340, %v1339
    %v1342 = vrot.slane %v1069, 5
    %v1343 = vsel %vm329, %v1342, %v1341
    %v1344 = vrot.slane %v1070, 4
    %v1345 = vsel %vm332, %v1344, %v1343
    %v1346 = vrot.slane %v1071, 3
    %v1347 = vsel %vm335, %v1346, %v1345
    %v1348 = vrot.slane %v1072, 2
    %v1349 = vsel %vm338, %v1348, %v1347
    %v1350 = vrot.slane %v1073, 1
    %v1351 = vsel %vm341, %v1350, %v1349
    %v1352 = vrot.slane %v1075, 7
    %v1353 = vsel %vm323, %v1352, %v1074
    %v1354 = vrot.slane %v1076, 6
    %v1355 = vsel %vm326, %v1354, %v1353
    %v1356 = vrot.slane %v1077, 5
    %v1357 = vsel %vm329, %v1356, %v1355
    %v1358 = vrot.slane %v1078, 4
    %v1359 = vsel %vm332, %v1358, %v1357
    %v1360 = vrot.slane %v1079, 3
    %v1361 = vsel %vm335, %v1360, %v1359
    %v1362 = vrot.slane %v1080, 2
    %v1363 = vsel %vm338, %v1362, %v1361
    %v1364 = vrot.slane %v1081, 1
    %v1365 = vsel %vm341, %v1364, %v1363
    %1366 = vset.pattern.permute.xlu0 2
    %1367 = vperm.xlu0 %1366, %v1351
    %v1368 = vpop.permute.xlu0 %1367
    %1369 = vset.pattern.permute.xlu0 2
    %1370 = vperm.xlu0 %1369, %v1365
    %v1371 = vpop.permute.xlu0 %1370
    %v1372 = vperm.slane %v1368, %v364
    %v1373 = vperm.slane %v1371, %v364
    %v1374 = vsel %vm323, %v1373, %v1372
    %s1376 = scalar_lea.vmem %s1, 36
    %1377 = vst.msk [vmem:[%s1376] sm:$0x3] %vm369, %v1374
    %v1394 = vsel %vm323, %v1111, %v1104
    %v1395 = vsel %vm326, %v1118, %v1394
    %v1396 = vsel %vm329, %v1125, %v1395
    %v1397 = vsel %vm332, %v1132, %v1396
    %v1398 = vsel %vm335, %v1139, %v1397
    %v1399 = vsel %vm338, %v1146, %v1398
    %v1400 = vsel %vm341, %v1153, %v1399
    %v1401 = vsel %vm323, %v1167, %v1160
    %v1402 = vsel %vm326, %v1174, %v1401
    %v1403 = vsel %vm329, %v1181, %v1402
    %v1404 = vsel %vm332, %v1188, %v1403
    %v1405 = vsel %vm335, %v1195, %v1404
    %v1406 = vsel %vm338, %v1202, %v1405
    %v1407 = vsel %vm341, %v1209, %v1406
    %v1410 = vsel %vm403, %v1400, 0.0
    %1411 = vadd.xlane.f32.xlu0 %v1410
    %v1412 = vpop.xlane.xlu0 %1411
    %v1413 = vsel %vm403, %v1407, 0.0
    %1414 = vadd.xlane.f32.xlu0 %v1413
    %v1415 = vpop.xlane.xlu0 %1414
    %v1416 = vmul.f32 %v1412, 0.027777778
    %v1417 = vmul.f32 %v1415, 0.027777778
    %v1420 = vperm.slane %v1416, %v364
    %v1421 = vperm.slane %v1417, %v364
    %v1422 = vsel %vm323, %v1421, %v1420
    %s1424 = scalar_lea.vmem %s1, 38
    %1425 = vst.msk [vmem:[%s1424] sm:$0x3] %vm369, %v1422
    %v1442 = vsel %vm323, %v1223, %v1216
    %v1443 = vsel %vm326, %v1230, %v1442
    %v1444 = vsel %vm329, %v1237, %v1443
    %v1445 = vsel %vm332, %v1244, %v1444
    %v1446 = vsel %vm335, %v1251, %v1445
    %v1447 = vsel %vm338, %v1258, %v1446
    %v1448 = vsel %vm341, %v1265, %v1447
    %v1449 = vsel %vm323, %v1279, %v1272
    %v1450 = vsel %vm326, %v1286, %v1449
    %v1451 = vsel %vm329, %v1293, %v1450
    %v1452 = vsel %vm332, %v1300, %v1451
    %v1453 = vsel %vm335, %v1307, %v1452
    %v1454 = vsel %vm338, %v1314, %v1453
    %v1455 = vsel %vm341, %v1321, %v1454
    %v1458 = vsel %vm403, %v1448, -inf
    %1459 = vmax.xlane.f32.xlu0 %v1458
    %v1460 = vpop.xlane.xlu0 %1459
    %v1461 = vsel %vm403, %v1455, -inf
    %1462 = vmax.xlane.f32.xlu0 %v1461
    %v1463 = vpop.xlane.xlu0 %1462
    %v1466 = vperm.slane %v1460, %v364
    %v1467 = vperm.slane %v1463, %v364
    %v1468 = vsel %vm323, %v1467, %v1466
    %s1470 = scalar_lea.vmem %s1, 40
    %1471 = vst.msk [vmem:[%s1470] sm:$0x3] %vm369, %v1468
    %1472 = vset.pattern.permute.xlu0 7
    %1473 = vperm.xlu0 %1472, %v1351
    %v1474 = vpop.permute.xlu0 %1473
    %1475 = vset.pattern.permute.xlu0 7
    %1476 = vperm.xlu0 %1475, %v1365
    %v1477 = vpop.permute.xlu0 %1476
    %v1478 = vperm.slane %v1474, %v364
    %v1479 = vperm.slane %v1477, %v364
    %v1480 = vsel %vm323, %v1479, %v1478
    %s1482 = scalar_lea.vmem %s1, 42
    %1483 = vst.msk [vmem:[%s1482] sm:$0x3] %vm369, %v1480
    %1484 = vrot.lane.b32.xlu0 %v1400, 123
    %v1485 = vpop.permute.xlu0 %1484
    %1486 = vrot.lane.b32.xlu0 %v1407, 123
    %v1487 = vpop.permute.xlu0 %1486
    %v1490 = vsel %vm403, %v1485, 0.0
    %1491 = vadd.xlane.f32.xlu0 %v1490
    %v1492 = vpop.xlane.xlu0 %1491
    %v1493 = vsel %vm403, %v1487, 0.0
    %1494 = vadd.xlane.f32.xlu0 %v1493
    %v1495 = vpop.xlane.xlu0 %1494
    %v1496 = vmul.f32 %v1492, 0.027777778
    %v1497 = vmul.f32 %v1495, 0.027777778
    %v1500 = vperm.slane %v1496, %v364
    %v1501 = vperm.slane %v1497, %v364
    %v1502 = vsel %vm323, %v1501, %v1500
    %s1504 = scalar_lea.vmem %s1, 44
    %1505 = vst.msk [vmem:[%s1504] sm:$0x3] %vm369, %v1502
    %v1506 = vsel %vm500, %v1448, -inf
    %1507 = vmax.xlane.f32.xlu0 %v1506
    %v1508 = vpop.xlane.xlu0 %1507
    %v1509 = vsel %vm500, %v1455, -inf
    %1510 = vmax.xlane.f32.xlu0 %v1509
    %v1511 = vpop.xlane.xlu0 %1510
    %v1514 = vperm.slane %v1508, %v364
    %v1515 = vperm.slane %v1511, %v364
    %v1516 = vsel %vm323, %v1515, %v1514
    %s1518 = scalar_lea.vmem %s1, 46
    %1519 = vst.msk [vmem:[%s1518] sm:$0x3] %vm369, %v1516
    %1520 = vset.pattern.permute.xlu0 12
    %1521 = vperm.xlu0 %1520, %v1351
    %v1522 = vpop.permute.xlu0 %1521
    %1523 = vset.pattern.permute.xlu0 12
    %1524 = vperm.xlu0 %1523, %v1365
    %v1525 = vpop.permute.xlu0 %1524
    %v1526 = vperm.slane %v1522, %v364
    %v1527 = vperm.slane %v1525, %v364
    %v1528 = vsel %vm323, %v1527, %v1526
    %s1530 = scalar_lea.vmem %s1, 48
    %1531 = vst.msk [vmem:[%s1530] sm:$0x3] %vm369, %v1528
    %1532 = vrot.lane.b32.xlu0 %v1400, 118
    %v1533 = vpop.permute.xlu0 %1532
    %1534 = vrot.lane.b32.xlu0 %v1407, 118
    %v1535 = vpop.permute.xlu0 %1534
    %v1538 = vsel %vm403, %v1533, 0.0
    %1539 = vadd.xlane.f32.xlu0 %v1538
    %v1540 = vpop.xlane.xlu0 %1539
    %v1541 = vsel %vm403, %v1535, 0.0
    %1542 = vadd.xlane.f32.xlu0 %v1541
    %v1543 = vpop.xlane.xlu0 %1542
    %v1544 = vmul.f32 %v1540, 0.027777778
    %v1545 = vmul.f32 %v1543, 0.027777778
    %v1548 = vperm.slane %v1544, %v364
    %v1549 = vperm.slane %v1545, %v364
    %v1550 = vsel %vm323, %v1549, %v1548
    %s1552 = scalar_lea.vmem %s1, 50
    %1553 = vst.msk [vmem:[%s1552] sm:$0x3] %vm369, %v1550
    %v1554 = vsel %vm549, %v1448, -inf
    %1555 = vmax.xlane.f32.xlu0 %v1554
    %v1556 = vpop.xlane.xlu0 %1555
    %v1557 = vsel %vm549, %v1455, -inf
    %1558 = vmax.xlane.f32.xlu0 %v1557
    %v1559 = vpop.xlane.xlu0 %1558
    %v1562 = vperm.slane %v1556, %v364
    %v1563 = vperm.slane %v1559, %v364
    %v1564 = vsel %vm323, %v1563, %v1562
    %s1566 = scalar_lea.vmem %s1, 52
    %1567 = vst.msk [vmem:[%s1566] sm:$0x3] %vm369, %v1564
    // Predicated region
    $region10: #{tpu_custom_call.1} parent=1 // pred_check
      _
    $region11: #{tpu_custom_call.1} parent=1 // pred_check_branch
      %1569 = sbr.rel (0) target = $region13
    $region12: #{tpu_custom_call.1} parent=1 // pred_region
      _
    $region13: #{tpu_custom_call.1} parent=1 // pred_fallthru
      _
    // Predicated region
    $region14: #{tpu_custom_call.1} parent=1 // pred_check
      _
    $region15: #{tpu_custom_call.1} parent=1 // pred_check_branch
      %1571 = sbr.rel (0) target = $region17
    $region16: #{tpu_custom_call.1} parent=1 // pred_region
      _
    $region17: #{tpu_custom_call.1} parent=1 // pred_fallthru
      _
    %1572 = vsyncpa [#allocation3], 1

</llo_original>
